<compile_context>
chip_gen: v5e
topology: v5e:2x2
jax: 0.10.0
libtpu: 0.0.40
codegen_flags: <defaults>
</compile_context>

<pallas_src>
import functools
import math

import jax
import jax.numpy as jnp
from jax.experimental import pallas as pl
from jax.experimental.pallas import tpu as pltpu

INPUT_SIZE = 837
LN_EPS = 1e-5
LANE = 128
SUBLANE = 8
INV_SQRT2 = 1.0 / math.sqrt(2.0)
SQRT_2_OVER_PI = math.sqrt(2.0 / math.pi)
GELU_C = 0.044715


def _round_up(n, m):
    return (n + m - 1) // m * m


def _device_kind():
    try:
        return jax.devices()[0].device_kind.lower()
    except Exception:
        return ""


def _is_v7():
    kind = _device_kind()
    return ("v7" in kind) or ("7x" in kind)


# ---------------------------------------------------------------------------
# Kernel
# ---------------------------------------------------------------------------
def init_block_kernel(x_ref, wf_ref, w2_ref, bh_ref, cs_ref, bo_ref, o_ref,
                      *, hidden_pad, out_width):
    """One batch tile of InitBlock forward (inference; dropout = identity).

    x_ref  : (TB, 837)              f32   unpadded features
    wf_ref : (837, H_pad + O_pad)   bf16  [gamma*W1 | Ws], column-padded
    w2_ref : (H_pad, O_pad)         bf16  W2, zero-padded
    bh_ref : (1, H_pad)             f32   beta @ W1 + b1
    cs_ref : (1, O_pad)             f32   column sums of Ws
    bo_ref : (1, O_pad)             f32   bs + b2
    o_ref  : (TB, out_width)        f32   unpadded output tile
    """
    x = x_ref[...].astype(jnp.float32)
    n = x.shape[-1]  # 837 (static)

    # --- LayerNorm statistics: two-pass centered variance (cancellation-safe) ---
    mean = jnp.sum(x, axis=-1, keepdims=True) * (1.0 / n)
    xc = x - mean
    var = jnp.sum(xc * xc, axis=-1, keepdims=True) * (1.0 / n)
    rstd = jax.lax.rsqrt(var + LN_EPS)

    # --- fused K=837 contraction: xc @ [gamma*W1 | Ws]  (bf16 MXU, f32 acc) ---
    fused = jnp.dot(xc.astype(jnp.bfloat16), wf_ref[...],
                    preferred_element_type=jnp.float32)

    # --- hidden branch: finish LayerNorm (rstd; beta folded into bias) + GELU ---
    h = rstd * fused[:, :hidden_pad] + bh_ref[...]
    # tanh-approx GELU (EUP path; ~1e-3 from exact erf GELU, within tolerance).
    h = 0.5 * h * (1.0 + jnp.tanh(SQRT_2_OVER_PI * (h + GELU_C * h * h * h)))
    # TODO(synk): training-mode dropout (rate=0.3) not implemented; inference only.

    y = jnp.dot(h.astype(jnp.bfloat16), w2_ref[...],
                preferred_element_type=jnp.float32)

    # --- skip projection: x @ Ws = xc @ Ws + mean * colsum(Ws) ---
    res = fused[:, hidden_pad:] + mean * cs_ref[...]

    out = res + y + bo_ref[...]
    # Store only the useful columns (out_width == full array dim of o_ref).
    o_ref[...] = out[:, :out_width].astype(o_ref.dtype)


# ---------------------------------------------------------------------------
# Parameter preparation (fold gamma/beta/biases, fuse & pad weights, cast bf16)
# ---------------------------------------------------------------------------
def prepare_kernel_params(p):
    gamma = p["ln_gamma"].reshape(-1)
    beta = p["ln_beta"].reshape(-1)
    w1t, w2t, wst = p["w1_t"], p["w2_t"], p["ws_t"]          # (837,H) (H,W) (837,W)
    b1 = p["b1"].reshape(-1)
    b2 = p["b2"].reshape(-1)
    bs = p["bs"].reshape(-1)

    hidden = w1t.shape[1]
    width = w2t.shape[1]
    h_pad = _round_up(hidden, LANE)
    o_pad = _round_up(width, LANE)

    wg1 = w1t * gamma[:, None]                                # gamma folded into W1
    wf = jnp.zeros((INPUT_SIZE, h_pad + o_pad), jnp.float32)
    wf = wf.at[:, :hidden].set(wg1)
    wf = wf.at[:, h_pad:h_pad + width].set(wst)

    w2p = jnp.zeros((h_pad, o_pad), jnp.float32).at[:hidden, :width].set(w2t)

    bh = jnp.zeros((1, h_pad), jnp.float32).at[0, :hidden].set(beta @ w1t + b1)
    cs = jnp.zeros((1, o_pad), jnp.float32).at[0, :width].set(jnp.sum(wst, axis=0))
    bo = jnp.zeros((1, o_pad), jnp.float32).at[0, :width].set(bs + b2)

    return {
        "wf": wf.astype(jnp.bfloat16),
        "w2": w2p.astype(jnp.bfloat16),
        "bh": bh, "cs": cs, "bo": bo,
        "h_pad": h_pad, "o_pad": o_pad, "width": width,
    }


def _vmem_limit_bytes(tb, h_pad, o_pad, width):
    """Explicit VMEM accounting with headroom, capped per chip generation."""
    k_lanes = _round_up(INPUT_SIZE, LANE)
    x_buf = 2 * tb * k_lanes * 4                         # double-buffered x tile
    out_buf = 2 * tb * _round_up(width, LANE) * 4        # double-buffered out tile
    w_bytes = (INPUT_SIZE * (h_pad + o_pad) + h_pad * o_pad) * 2   # bf16, 1-buffered
    bias_bytes = (h_pad + 2 * o_pad) * 4 * SUBLANE
    tmp_bytes = tb * (h_pad + o_pad) * 4 + tb * h_pad * 4 + tb * o_pad * 4
    need = int((x_buf + out_buf + w_bytes + bias_bytes + tmp_bytes) * 1.25) + (4 << 20)
    cap = (56 << 20) if _is_v7() else (100 << 20)        # v7x: 64 MiB VMEM; v5e/v6e: 128 MiB
    return max(16 << 20, min(need, cap))


# ---------------------------------------------------------------------------
# Wrapper
# ---------------------------------------------------------------------------
def init_block_forward(x, kparams, *, block_b=None):
    """x: (B, 837) -> (B, model_width) f32."""
    B = x.shape[0]
    assert x.shape[1] == INPUT_SIZE, f"expected {INPUT_SIZE} features, got {x.shape[1]}"
    h_pad = kparams["h_pad"]
    o_pad = kparams["o_pad"]
    width = kparams["width"]

    if block_b is None:
        block_b = 1024 if B >= 2048 else 512
    tb = min(block_b, _round_up(B, SUBLANE))
    grid_b = pl.cdiv(B, tb)

    x = x.astype(jnp.float32)

    kernel = functools.partial(init_block_kernel, hidden_pad=h_pad, out_width=width)

    # v7x has two TensorCores per chip: only CORE_PARALLEL actually splits the
    # grid across them.  Plain "parallel" elsewhere (1 TC on v5e/v6e).
    if _is_v7() and grid_b >= 2 and hasattr(pltpu, "CORE_PARALLEL"):
        dim_sem = (pltpu.CORE_PARALLEL,)
    else:
        dim_sem = ("parallel",)

    vmem_limit = _vmem_limit_bytes(tb, h_pad, o_pad, width)

    def _call(single_buffer):
        def resident(shape):
            # Constant-index-map operand: stays in VMEM across the grid.
            idx = lambda i: (0, 0)
            if single_buffer and hasattr(pl, "Buffered"):
                try:
                    return pl.BlockSpec(shape, idx, pipeline_mode=pl.Buffered(1))
                except TypeError:
                    pass
            return pl.BlockSpec(shape, idx)

        return pl.pallas_call(
            kernel,
            out_shape=jax.ShapeDtypeStruct((B, width), jnp.float32),
            grid_spec=pltpu.PrefetchScalarGridSpec(
                num_scalar_prefetch=0,
                grid=(grid_b,),
                in_specs=[
                    pl.BlockSpec((tb, INPUT_SIZE), lambda i: (i, 0)),   # x tile (unpadded)
                    resident((INPUT_SIZE, h_pad + o_pad)),              # fused [gamma*W1 | Ws]
                    resident((h_pad, o_pad)),                           # W2
                    resident((1, h_pad)),                               # bh
                    resident((1, o_pad)),                               # cs
                    resident((1, o_pad)),                               # bo
                ],
                out_specs=pl.BlockSpec((tb, width), lambda i: (i, 0)),  # unpadded output
            ),
            compiler_params=pltpu.CompilerParams(
                dimension_semantics=dim_sem,
                vmem_limit_bytes=vmem_limit,
            ),
        )(x, kparams["wf"], kparams["w2"], kparams["bh"], kparams["cs"],
          kparams["bo"])

    try:
        return _call(single_buffer=True)
    except Exception:
        # Fallback for environments where pipeline_mode/Buffered(1) is unsupported.
        return _call(single_buffer=False)


# ---------------------------------------------------------------------------
# Params / reference (exact erf GELU, f32 — matches the PyTorch module)
# ---------------------------------------------------------------------------
def make_params(key, model_width):
    k1, k2, k3 = jax.random.split(key, 3)
    fan_in = INPUT_SIZE
    hidden = model_width * 2

    # kaiming_normal_ (fan_in, gain=sqrt(2)) for linear1 and skip_proj
    std1 = math.sqrt(2.0 / fan_in)
    w1 = jax.random.normal(k1, (hidden, fan_in), jnp.float32) * std1
    ws = jax.random.normal(k3, (model_width, fan_in), jnp.float32) * std1
    # xavier_normal_ for linear2
    std2 = math.sqrt(2.0 / (hidden + model_width))
    w2 = jax.random.normal(k2, (model_width, hidden), jnp.float32) * std2

    return {
        "ln_gamma": jnp.ones((1, INPUT_SIZE), jnp.float32),
        "ln_beta": jnp.zeros((1, INPUT_SIZE), jnp.float32),
        "w1_t": w1.T,                                   # (837, 2W)
        "b1": jnp.zeros((1, hidden), jnp.float32),
        "w2_t": w2.T,                                   # (2W, W)
        "b2": jnp.zeros((1, model_width), jnp.float32),
        "ws_t": ws.T,                                   # (837, W)
        "bs": jnp.zeros((1, model_width), jnp.float32),
    }


def reference_forward(x, p):
    mean = jnp.mean(x, axis=-1, keepdims=True)
    var = jnp.mean((x - mean) ** 2, axis=-1, keepdims=True)
    ln = (x - mean) / jnp.sqrt(var + LN_EPS) * p["ln_gamma"] + p["ln_beta"]
    h = ln @ p["w1_t"] + p["b1"]
    h = 0.5 * h * (1.0 + jax.lax.erf(h * INV_SQRT2))    # exact GELU (PyTorch default)
    y = h @ p["w2_t"] + p["b2"]
    res = x @ p["ws_t"] + p["bs"]
    return res + y


if __name__ == "__main__":
    key = jax.random.PRNGKey(0)
    kx, kparam_key = jax.random.split(key)

    batch = 8
    model_width = 32

    x = jax.random.normal(kx, (batch, INPUT_SIZE), jnp.float32)
    params = make_params(kparam_key, model_width)
    kparams = prepare_kernel_params(params)

    out = init_block_forward(x, kparams)
    out = jax.block_until_ready(out)

    ref = reference_forward(x, params)
    assert out.shape == (batch, model_width), out.shape
    max_err = float(jnp.max(jnp.abs(out - ref)))
    # bf16 matmul operands (f32 accumulation) + tanh GELU -> loosened tolerance.
    assert jnp.allclose(out, ref, atol=5e-2, rtol=5e-2), f"max_err={max_err}"

    print("KERNEL_OK")
</pallas_src>

<mosaic_0001>
module attributes {stable_mosaic.version = 11 : i64} {
  func.func @init_block_kernel(%arg0: i32, %arg1: memref<8x837xf32, #tpu.memory_space<vmem>>, %arg2: memref<837x256xbf16, #tpu.memory_space<vmem>>, %arg3: memref<128x128xbf16, #tpu.memory_space<vmem>>, %arg4: memref<1x128xf32, #tpu.memory_space<vmem>>, %arg5: memref<1x128xf32, #tpu.memory_space<vmem>>, %arg6: memref<1x128xf32, #tpu.memory_space<vmem>>, %arg7: memref<8x32xf32, #tpu.memory_space<vmem>>) attributes {dimension_semantics = [#tpu.dimension_semantics<parallel>], iteration_bounds = array<i64: 1>, scalar_prefetch = 0 : i64, scratch_operands = 0 : i64, tpu.core_type = #tpu.core_type<tc>, window_params = [{transform_indices = @transform_0, window_bounds = array<i64: 8, 837>}, {pipeline_mode = #tpu.pipeline_mode<synchronous>, transform_indices = @transform_1, window_bounds = array<i64: 837, 256>}, {pipeline_mode = #tpu.pipeline_mode<synchronous>, transform_indices = @transform_2, window_bounds = array<i64: 128, 128>}, {pipeline_mode = #tpu.pipeline_mode<synchronous>, transform_indices = @transform_3, window_bounds = array<i64: 1, 128>}, {pipeline_mode = #tpu.pipeline_mode<synchronous>, transform_indices = @transform_4, window_bounds = array<i64: 1, 128>}, {pipeline_mode = #tpu.pipeline_mode<synchronous>, transform_indices = @transform_5, window_bounds = array<i64: 1, 128>}, {transform_indices = @transform_6, window_bounds = array<i64: 8, 32>}]} {
    %c0 = arith.constant 0 : index
    %c0_0 = arith.constant 0 : index
    %0 = vector.load %arg1[%c0, %c0_0] : memref<8x837xf32, #tpu.memory_space<vmem>>, vector<8x837xf32>
    %cst = arith.constant dense<0.000000e+00> : vector<8xf32>
    %1 = vector.multi_reduction <add>, %0, %cst [1] : vector<8x837xf32> to vector<8xf32>
    %2 = vector.shape_cast %1 : vector<8xf32> to vector<8x1xf32>
    %cst_1 = arith.constant 0.00119474309 : f32
    %3 = vector.broadcast %cst_1 : f32 to vector<8x1xf32>
    %4 = arith.mulf %2, %3 : vector<8x1xf32>
    %5 = vector.broadcast %4 : vector<8x1xf32> to vector<8x837xf32>
    %6 = arith.subf %0, %5 : vector<8x837xf32>
    %7 = arith.mulf %6, %6 : vector<8x837xf32>
    %cst_2 = arith.constant dense<0.000000e+00> : vector<8xf32>
    %8 = vector.multi_reduction <add>, %7, %cst_2 [1] : vector<8x837xf32> to vector<8xf32>
    %9 = vector.shape_cast %8 : vector<8xf32> to vector<8x1xf32>
    %cst_3 = arith.constant 0.00119474309 : f32
    %10 = vector.broadcast %cst_3 : f32 to vector<8x1xf32>
    %11 = arith.mulf %9, %10 : vector<8x1xf32>
    %cst_4 = arith.constant 9.99999974E-6 : f32
    %12 = vector.broadcast %cst_4 : f32 to vector<8x1xf32>
    %13 = arith.addf %11, %12 : vector<8x1xf32>
    %14 = math.rsqrt %13 : vector<8x1xf32>
    %15 = arith.truncf %6 : vector<8x837xf32> to vector<8x837xbf16>
    %c0_5 = arith.constant 0 : index
    %c0_6 = arith.constant 0 : index
    %16 = vector.load %arg2[%c0_5, %c0_6] : memref<837x256xbf16, #tpu.memory_space<vmem>>, vector<837x256xbf16>
    %cst_7 = arith.constant dense<0.000000e+00> : vector<8x256xf32>
    %17 = tpu.matmul %15, %16, %cst_7 {dimension_numbers = #tpu.dot_dimension_numbers<[1], [0], [0], [1], [0, 0, 1, 1], [], []>} : vector<8x837xbf16>, vector<837x256xbf16>, vector<8x256xf32> -> vector<8x256xf32>
    %18 = vector.extract_strided_slice %17 {offsets = [0, 0], sizes = [8, 128], strides = [1, 1]} : vector<8x256xf32> to vector<8x128xf32>
    %19 = vector.broadcast %14 : vector<8x1xf32> to vector<8x128xf32>
    %20 = arith.mulf %19, %18 : vector<8x128xf32>
    %c0_8 = arith.constant 0 : index
    %c0_9 = arith.constant 0 : index
    %21 = vector.load %arg4[%c0_8, %c0_9] : memref<1x128xf32, #tpu.memory_space<vmem>>, vector<1x128xf32>
    %22 = vector.broadcast %21 : vector<1x128xf32> to vector<8x128xf32>
    %23 = arith.addf %20, %22 : vector<8x128xf32>
    %cst_10 = arith.constant 5.000000e-01 : f32
    %24 = vector.broadcast %cst_10 : f32 to vector<8x128xf32>
    %25 = arith.mulf %24, %23 : vector<8x128xf32>
    %cst_11 = arith.constant 4.471500e-02 : f32
    %26 = vector.broadcast %cst_11 : f32 to vector<8x128xf32>
    %27 = arith.mulf %26, %23 : vector<8x128xf32>
    %28 = arith.mulf %27, %23 : vector<8x128xf32>
    %29 = arith.mulf %28, %23 : vector<8x128xf32>
    %30 = arith.addf %23, %29 : vector<8x128xf32>
    %cst_12 = arith.constant 0.797884583 : f32
    %31 = vector.broadcast %cst_12 : f32 to vector<8x128xf32>
    %32 = arith.mulf %31, %30 : vector<8x128xf32>
    %33 = math.tanh %32 : vector<8x128xf32>
    %cst_13 = arith.constant 1.000000e+00 : f32
    %34 = vector.broadcast %cst_13 : f32 to vector<8x128xf32>
    %35 = arith.addf %34, %33 : vector<8x128xf32>
    %36 = arith.mulf %25, %35 : vector<8x128xf32>
    %37 = arith.truncf %36 : vector<8x128xf32> to vector<8x128xbf16>
    %c0_14 = arith.constant 0 : index
    %c0_15 = arith.constant 0 : index
    %38 = vector.load %arg3[%c0_14, %c0_15] : memref<128x128xbf16, #tpu.memory_space<vmem>>, vector<128x128xbf16>
    %cst_16 = arith.constant dense<0.000000e+00> : vector<8x128xf32>
    %39 = tpu.matmul %37, %38, %cst_16 {dimension_numbers = #tpu.dot_dimension_numbers<[1], [0], [0], [1], [0, 0, 1, 1], [], []>} : vector<8x128xbf16>, vector<128x128xbf16>, vector<8x128xf32> -> vector<8x128xf32>
    %40 = vector.extract_strided_slice %17 {offsets = [0, 128], sizes = [8, 128], strides = [1, 1]} : vector<8x256xf32> to vector<8x128xf32>
    %c0_17 = arith.constant 0 : index
    %c0_18 = arith.constant 0 : index
    %41 = vector.load %arg5[%c0_17, %c0_18] : memref<1x128xf32, #tpu.memory_space<vmem>>, vector<1x128xf32>
    %42 = vector.broadcast %4 : vector<8x1xf32> to vector<8x128xf32>
    %43 = vector.broadcast %41 : vector<1x128xf32> to vector<8x128xf32>
    %44 = arith.mulf %42, %43 : vector<8x128xf32>
    %45 = arith.addf %40, %44 : vector<8x128xf32>
    %46 = arith.addf %45, %39 : vector<8x128xf32>
    %c0_19 = arith.constant 0 : index
    %c0_20 = arith.constant 0 : index
    %47 = vector.load %arg6[%c0_19, %c0_20] : memref<1x128xf32, #tpu.memory_space<vmem>>, vector<1x128xf32>
    %48 = vector.broadcast %47 : vector<1x128xf32> to vector<8x128xf32>
    %49 = arith.addf %46, %48 : vector<8x128xf32>
    %50 = vector.extract_strided_slice %49 {offsets = [0, 0], sizes = [8, 32], strides = [1, 1]} : vector<8x128xf32> to vector<8x32xf32>
    %c0_21 = arith.constant 0 : index
    %c0_22 = arith.constant 0 : index
    %51 = vector.load %arg7[%c0_21, %c0_22] : memref<8x32xf32, #tpu.memory_space<vmem>>, vector<8x32xf32>
    tpu.vector_store %arg7[%c0_21, %c0_22], %50 {strides = array<i32>} : memref<8x32xf32, #tpu.memory_space<vmem>>, vector<8x32xf32>,
    return
  }
  func.func @transform_0(%arg0: i32) -> (i32, i32) {
    %c0_i32 = arith.constant 0 : i32
    %c0_i32_0 = arith.constant 0 : i32
    return %arg0, %c0_i32 : i32, i32
  }
  func.func @transform_1(%arg0: i32) -> (i32, i32) {
    %c0_i32 = arith.constant 0 : i32
    %c0_i32_0 = arith.constant 0 : i32
    %c0_i32_1 = arith.constant 0 : i32
    return %c0_i32, %c0_i32_0 : i32, i32
  }
  func.func @transform_2(%arg0: i32) -> (i32, i32) {
    %c0_i32 = arith.constant 0 : i32
    %c0_i32_0 = arith.constant 0 : i32
    %c0_i32_1 = arith.constant 0 : i32
    return %c0_i32, %c0_i32_0 : i32, i32
  }
  func.func @transform_3(%arg0: i32) -> (i32, i32) {
    %c0_i32 = arith.constant 0 : i32
    %c0_i32_0 = arith.constant 0 : i32
    %c0_i32_1 = arith.constant 0 : i32
    return %c0_i32, %c0_i32_0 : i32, i32
  }
  func.func @transform_4(%arg0: i32) -> (i32, i32) {
    %c0_i32 = arith.constant 0 : i32
    %c0_i32_0 = arith.constant 0 : i32
    %c0_i32_1 = arith.constant 0 : i32
    return %c0_i32, %c0_i32_0 : i32, i32
  }
  func.func @transform_5(%arg0: i32) -> (i32, i32) {
    %c0_i32 = arith.constant 0 : i32
    %c0_i32_0 = arith.constant 0 : i32
    %c0_i32_1 = arith.constant 0 : i32
    return %c0_i32, %c0_i32_0 : i32, i32
  }
  func.func @transform_6(%arg0: i32) -> (i32, i32) {
    %c0_i32 = arith.constant 0 : i32
    %c0_i32_0 = arith.constant 0 : i32
    return %arg0, %c0_i32 : i32, i32
  }
}

module attributes {stable_mosaic.version = 11 : i64} {
  func.func @init_block_kernel(%arg0: i32, %arg1: memref<8x837xf32, #tpu.memory_space<vmem>>, %arg2: memref<837x256xbf16, #tpu.memory_space<vmem>>, %arg3: memref<128x128xbf16, #tpu.memory_space<vmem>>, %arg4: memref<1x128xf32, #tpu.memory_space<vmem>>, %arg5: memref<1x128xf32, #tpu.memory_space<vmem>>, %arg6: memref<1x128xf32, #tpu.memory_space<vmem>>, %arg7: memref<8x32xf32, #tpu.memory_space<vmem>>) attributes {dimension_semantics = [#tpu.dimension_semantics<parallel>], iteration_bounds = array<i64: 1>, scalar_prefetch = 0 : i64, scratch_operands = 0 : i64, tpu.core_type = #tpu.core_type<tc>, window_params = [{transform_indices = @transform_0, window_bounds = array<i64: 8, 837>}, {pipeline_mode = #tpu.pipeline_mode<synchronous>, transform_indices = @transform_1, window_bounds = array<i64: 837, 256>}, {pipeline_mode = #tpu.pipeline_mode<synchronous>, transform_indices = @transform_2, window_bounds = array<i64: 128, 128>}, {pipeline_mode = #tpu.pipeline_mode<synchronous>, transform_indices = @transform_3, window_bounds = array<i64: 1, 128>}, {pipeline_mode = #tpu.pipeline_mode<synchronous>, transform_indices = @transform_4, window_bounds = array<i64: 1, 128>}, {pipeline_mode = #tpu.pipeline_mode<synchronous>, transform_indices = @transform_5, window_bounds = array<i64: 1, 128>}, {transform_indices = @transform_6, window_bounds = array<i64: 8, 32>}]} {
    %c0 = arith.constant 0 : index
    %c0_0 = arith.constant 0 : index
    %0 = vector.load %arg1[%c0, %c0_0] : memref<8x837xf32, #tpu.memory_space<vmem>>, vector<8x837xf32>
    %cst = arith.constant dense<0.000000e+00> : vector<8xf32>
    %1 = vector.multi_reduction <add>, %0, %cst [1] : vector<8x837xf32> to vector<8xf32>
    %2 = vector.shape_cast %1 : vector<8xf32> to vector<8x1xf32>
    %cst_1 = arith.constant 0.00119474309 : f32
    %3 = vector.broadcast %cst_1 : f32 to vector<8x1xf32>
    %4 = arith.mulf %2, %3 : vector<8x1xf32>
    %5 = vector.broadcast %4 : vector<8x1xf32> to vector<8x837xf32>
    %6 = arith.subf %0, %5 : vector<8x837xf32>
    %7 = arith.mulf %6, %6 : vector<8x837xf32>
    %cst_2 = arith.constant dense<0.000000e+00> : vector<8xf32>
    %8 = vector.multi_reduction <add>, %7, %cst_2 [1] : vector<8x837xf32> to vector<8xf32>
    %9 = vector.shape_cast %8 : vector<8xf32> to vector<8x1xf32>
    %cst_3 = arith.constant 0.00119474309 : f32
    %10 = vector.broadcast %cst_3 : f32 to vector<8x1xf32>
    %11 = arith.mulf %9, %10 : vector<8x1xf32>
    %cst_4 = arith.constant 9.99999974E-6 : f32
    %12 = vector.broadcast %cst_4 : f32 to vector<8x1xf32>
    %13 = arith.addf %11, %12 : vector<8x1xf32>
    %14 = math.rsqrt %13 : vector<8x1xf32>
    %15 = arith.truncf %6 : vector<8x837xf32> to vector<8x837xbf16>
    %c0_5 = arith.constant 0 : index
    %c0_6 = arith.constant 0 : index
    %16 = vector.load %arg2[%c0_5, %c0_6] : memref<837x256xbf16, #tpu.memory_space<vmem>>, vector<837x256xbf16>
    %cst_7 = arith.constant dense<0.000000e+00> : vector<8x256xf32>
    %17 = tpu.matmul %15, %16, %cst_7 {dimension_numbers = #tpu.dot_dimension_numbers<[1], [0], [0], [1], [0, 0, 1, 1], [], []>} : vector<8x837xbf16>, vector<837x256xbf16>, vector<8x256xf32> -> vector<8x256xf32>
    %18 = vector.extract_strided_slice %17 {offsets = [0, 0], sizes = [8, 128], strides = [1, 1]} : vector<8x256xf32> to vector<8x128xf32>
    %19 = vector.broadcast %14 : vector<8x1xf32> to vector<8x128xf32>
    %20 = arith.mulf %19, %18 : vector<8x128xf32>
    %c0_8 = arith.constant 0 : index
    %c0_9 = arith.constant 0 : index
    %21 = vector.load %arg4[%c0_8, %c0_9] : memref<1x128xf32, #tpu.memory_space<vmem>>, vector<1x128xf32>
    %22 = vector.broadcast %21 : vector<1x128xf32> to vector<8x128xf32>
    %23 = arith.addf %20, %22 : vector<8x128xf32>
    %cst_10 = arith.constant 5.000000e-01 : f32
    %24 = vector.broadcast %cst_10 : f32 to vector<8x128xf32>
    %25 = arith.mulf %24, %23 : vector<8x128xf32>
    %cst_11 = arith.constant 4.471500e-02 : f32
    %26 = vector.broadcast %cst_11 : f32 to vector<8x128xf32>
    %27 = arith.mulf %26, %23 : vector<8x128xf32>
    %28 = arith.mulf %27, %23 : vector<8x128xf32>
    %29 = arith.mulf %28, %23 : vector<8x128xf32>
    %30 = arith.addf %23, %29 : vector<8x128xf32>
    %cst_12 = arith.constant 0.797884583 : f32
    %31 = vector.broadcast %cst_12 : f32 to vector<8x128xf32>
    %32 = arith.mulf %31, %30 : vector<8x128xf32>
    %33 = math.tanh %32 : vector<8x128xf32>
    %cst_13 = arith.constant 1.000000e+00 : f32
    %34 = vector.broadcast %cst_13 : f32 to vector<8x128xf32>
    %35 = arith.addf %34, %33 : vector<8x128xf32>
    %36 = arith.mulf %25, %35 : vector<8x128xf32>
    %37 = arith.truncf %36 : vector<8x128xf32> to vector<8x128xbf16>
    %c0_14 = arith.constant 0 : index
    %c0_15 = arith.constant 0 : index
    %38 = vector.load %arg3[%c0_14, %c0_15] : memref<128x128xbf16, #tpu.memory_space<vmem>>, vector<128x128xbf16>
    %cst_16 = arith.constant dense<0.000000e+00> : vector<8x128xf32>
    %39 = tpu.matmul %37, %38, %cst_16 {dimension_numbers = #tpu.dot_dimension_numbers<[1], [0], [0], [1], [0, 0, 1, 1], [], []>} : vector<8x128xbf16>, vector<128x128xbf16>, vector<8x128xf32> -> vector<8x128xf32>
    %40 = vector.extract_strided_slice %17 {offsets = [0, 128], sizes = [8, 128], strides = [1, 1]} : vector<8x256xf32> to vector<8x128xf32>
    %c0_17 = arith.constant 0 : index
    %c0_18 = arith.constant 0 : index
    %41 = vector.load %arg5[%c0_17, %c0_18] : memref<1x128xf32, #tpu.memory_space<vmem>>, vector<1x128xf32>
    %42 = vector.broadcast %4 : vector<8x1xf32> to vector<8x128xf32>
    %43 = vector.broadcast %41 : vector<1x128xf32> to vector<8x128xf32>
    %44 = arith.mulf %42, %43 : vector<8x128xf32>
    %45 = arith.addf %40, %44 : vector<8x128xf32>
    %46 = arith.addf %45, %39 : vector<8x128xf32>
    %c0_19 = arith.constant 0 : index
    %c0_20 = arith.constant 0 : index
    %47 = vector.load %arg6[%c0_19, %c0_20] : memref<1x128xf32, #tpu.memory_space<vmem>>, vector<1x128xf32>
    %48 = vector.broadcast %47 : vector<1x128xf32> to vector<8x128xf32>
    %49 = arith.addf %46, %48 : vector<8x128xf32>
    %50 = vector.extract_strided_slice %49 {offsets = [0, 0], sizes = [8, 32], strides = [1, 1]} : vector<8x128xf32> to vector<8x32xf32>
    %c0_21 = arith.constant 0 : index
    %c0_22 = arith.constant 0 : index
    %51 = vector.load %arg7[%c0_21, %c0_22] : memref<8x32xf32, #tpu.memory_space<vmem>>, vector<8x32xf32>
    tpu.vector_store %arg7[%c0_21, %c0_22], %50 {strides = array<i32>} : memref<8x32xf32, #tpu.memory_space<vmem>>, vector<8x32xf32>,
    return
  }
  func.func @transform_0(%arg0: i32) -> (i32, i32) {
    %c0_i32 = arith.constant 0 : i32
    %c0_i32_0 = arith.constant 0 : i32
    return %arg0, %c0_i32 : i32, i32
  }
  func.func @transform_1(%arg0: i32) -> (i32, i32) {
    %c0_i32 = arith.constant 0 : i32
    %c0_i32_0 = arith.constant 0 : i32
    %c0_i32_1 = arith.constant 0 : i32
    return %c0_i32, %c0_i32_0 : i32, i32
  }
  func.func @transform_2(%arg0: i32) -> (i32, i32) {
    %c0_i32 = arith.constant 0 : i32
    %c0_i32_0 = arith.constant 0 : i32
    %c0_i32_1 = arith.constant 0 : i32
    return %c0_i32, %c0_i32_0 : i32, i32
  }
  func.func @transform_3(%arg0: i32) -> (i32, i32) {
    %c0_i32 = arith.constant 0 : i32
    %c0_i32_0 = arith.constant 0 : i32
    %c0_i32_1 = arith.constant 0 : i32
    return %c0_i32, %c0_i32_0 : i32, i32
  }
  func.func @transform_4(%arg0: i32) -> (i32, i32) {
    %c0_i32 = arith.constant 0 : i32
    %c0_i32_0 = arith.constant 0 : i32
    %c0_i32_1 = arith.constant 0 : i32
    return %c0_i32, %c0_i32_0 : i32, i32
  }
  func.func @transform_5(%arg0: i32) -> (i32, i32) {
    %c0_i32 = arith.constant 0 : i32
    %c0_i32_0 = arith.constant 0 : i32
    %c0_i32_1 = arith.constant 0 : i32
    return %c0_i32, %c0_i32_0 : i32, i32
  }
  func.func @transform_6(%arg0: i32) -> (i32, i32) {
    %c0_i32 = arith.constant 0 : i32
    %c0_i32_0 = arith.constant 0 : i32
    return %arg0, %c0_i32 : i32, i32
  }
}

</mosaic_0001>

<llo_original>
// kernel: tpu_custom_call.1
$region0: #{tpu_custom_call.1}
  #allocation0 [shape = 'u32[]', space=smem, size = 0x4, offset = 0x4, fixed_abs, tag = 'smem constant byte address 0x4 - core index']
  #allocation1 [shape = 'u32[72,128]{1,0:T(1,128)}', space=vmem, size = 0x9000, scoped, tag = 'internal scratch']
  %s0 = inlined_call_operand.hbm [shape: f32[8,837], index: 0, kind: input, shape index: {}]
  %s1 = inlined_call_operand.hbm [shape: bf16[837,256], index: 1, kind: input, shape index: {}]
  %s2 = inlined_call_operand.hbm [shape: bf16[128,128], index: 2, kind: input, shape index: {}]
  %s3 = inlined_call_operand.vmem [shape: f32[1,128], index: 3, kind: input, shape index: {}]
  %s4 = inlined_call_operand.vmem [shape: f32[1,128], index: 4, kind: input, shape index: {}]
  %s5 = inlined_call_operand.vmem [shape: f32[1,128], index: 5, kind: input, shape index: {}]
  %s6 = inlined_call_operand.hbm [shape: f32[8,32], index: 6, kind: output, shape index: {}]
  %s7 = sld [smem:[#allocation0]]
  $region46: #{tpu_custom_call.1} parent=0
    _
  %s9 = ssub.s32 1, %s7
  %s10 = scalar_select 0, %s9, %s7
  $region1: #{tpu_custom_call.1} parent=0
    #allocation2 [shape = 'u8[28672]{0}', space=vmem, size = 0x7000, scoped, tag = 'input window, operand 0, single buffered']
    #allocation3 [shape = 's32[1]{0}', space=sflag, size = 0x4, scoped, tag = 'scoped memory for tpu_custom_call.1']
    #allocation4 [shape = 's32[1]{0}', space=sflag, size = 0x4, scoped, tag = 'scoped memory for tpu_custom_call.1']
    #allocation5 [shape = 'u8[430080]{0}', space=vmem, size = 0x69000, scoped, tag = 'input window, operand 1, single buffered']
    #allocation6 [shape = 's32[1]{0}', space=sflag, size = 0x4, scoped, tag = 'scoped memory for tpu_custom_call.1']
    #allocation7 [shape = 'u8[32768]{0}', space=vmem, size = 0x8000, scoped, tag = 'input window, operand 2, single buffered']
    #allocation8 [shape = 'u8[4096]{0}', space=vmem, size = 0x1000, scoped, tag = 'output window, operand 0, single buffered']
    %11 = vsyncpa [#allocation3], 0
    %12 = vsyncpa [#allocation6], 0
    %13 = vsyncpa [#allocation4], 0
    // Predicated region
    $region2: #{tpu_custom_call.1} parent=1 // pred_check
      _
    $region3: #{tpu_custom_call.1} parent=1 // pred_check_branch
      %15 = sbr.rel (0) target = $region5
    $region4: #{tpu_custom_call.1} parent=1 // pred_region
      %17 = vsyncadd [#allocation3], 0
      %s19 = sshll.u32 %s0, 4
      %s20 = int_to_ptr.hbm [resolvable:$true] %s19
      %s21 = sshll.u32 [#allocation2], 4
      %s22 = int_to_ptr.vmem [resolvable:$true] %s21
      %24 = dma.hbm_to_vmem [thread:$0]  %s20, 896, %s22, [#allocation3]
    $region5: #{tpu_custom_call.1} parent=1 // pred_fallthru
      _
    // Predicated region
    $region6: #{tpu_custom_call.1} parent=1 // pred_check
      _
    $region7: #{tpu_custom_call.1} parent=1 // pred_check_branch
      %26 = sbr.rel (0) target = $region9
    $region8: #{tpu_custom_call.1} parent=1 // pred_region
      %28 = vsyncadd [#allocation6], 0
      %s29 = sshll.u32 %s1, 4
      %s30 = int_to_ptr.hbm [resolvable:$true] %s29
      %s31 = sshll.u32 [#allocation5], 4
      %s32 = int_to_ptr.vmem [resolvable:$true] %s31
      %37 = dma.hbm_to_vmem [thread:$0]  %s30, 13440, %s32, [#allocation6], 128, 128, 8
    $region9: #{tpu_custom_call.1} parent=1 // pred_fallthru
      _
    // Predicated region
    $region10: #{tpu_custom_call.1} parent=1 // pred_check
      _
    $region11: #{tpu_custom_call.1} parent=1 // pred_check_branch
      %39 = sbr.rel (0) target = $region13
    $region12: #{tpu_custom_call.1} parent=1 // pred_region
      %41 = vsyncadd [#allocation6], 0
      %s42 = sshll.u32 %s2, 4
      %s43 = int_to_ptr.hbm [resolvable:$true] %s42
      %s44 = sshll.u32 [#allocation7], 4
      %s45 = int_to_ptr.vmem [resolvable:$true] %s44
      %50 = dma.hbm_to_vmem [thread:$0]  %s43, 1024, %s45, [#allocation6], 64, 64, 4
    $region13: #{tpu_custom_call.1} parent=1 // pred_fallthru
      _
    // Predicated region
    $region14: #{tpu_custom_call.1} parent=1 // pred_check
      _
    $region15: #{tpu_custom_call.1} parent=1 // pred_check_branch
      %52 = sbr.rel (0) target = $region17
    $region16: #{tpu_custom_call.1} parent=1 // pred_region
      _
    $region17: #{tpu_custom_call.1} parent=1 // pred_fallthru
      _
    // Predicated region
    $region18: #{tpu_custom_call.1} parent=1 // pred_check
      _
    $region19: #{tpu_custom_call.1} parent=1 // pred_check_branch
      %54 = sbr.rel (0) target = $region21
    $region20: #{tpu_custom_call.1} parent=1 // pred_region
      _
    $region21: #{tpu_custom_call.1} parent=1 // pred_fallthru
      _
    // Predicated region
    $region22: #{tpu_custom_call.1} parent=1 // pred_check
      _
    $region23: #{tpu_custom_call.1} parent=1 // pred_check_branch
      %56 = sbr.rel (0) target = $region25
    $region24: #{tpu_custom_call.1} parent=1 // pred_region
      _
    $region25: #{tpu_custom_call.1} parent=1 // pred_fallthru
      _
    // Predicated region
    $region26: #{tpu_custom_call.1} parent=1 // pred_check
      _
    $region27: #{tpu_custom_call.1} parent=1 // pred_check_branch
      %58 = sbr.rel (0) target = $region29
    $region28: #{tpu_custom_call.1} parent=1 // pred_region
      %60 = dma.done [#allocation3], 896
    $region29: #{tpu_custom_call.1} parent=1 // pred_fallthru
      _
    // Predicated region
    $region30: #{tpu_custom_call.1} parent=1 // pred_check
      _
    $region31: #{tpu_custom_call.1} parent=1 // pred_check_branch
      %62 = sbr.rel (0) target = $region33
    $region32: #{tpu_custom_call.1} parent=1 // pred_region
      %64 = dma.done [#allocation6], 13440
    $region33: #{tpu_custom_call.1} parent=1 // pred_fallthru
      _
    // Predicated region
    $region34: #{tpu_custom_call.1} parent=1 // pred_check
      _
    $region35: #{tpu_custom_call.1} parent=1 // pred_check_branch
      %66 = sbr.rel (0) target = $region37
    $region36: #{tpu_custom_call.1} parent=1 // pred_region
      %68 = dma.done [#allocation6], 1024
    $region37: #{tpu_custom_call.1} parent=1 // pred_fallthru
      _
    %v70 = vld [vmem:[#allocation2] sm:$0xff]
    %v71 = vld [vmem:[#allocation2 + $0x8] sm:$0xff]
    %v72 = vld [vmem:[#allocation2 + $0x10] sm:$0xff]
    %v73 = vld [vmem:[#allocation2 + $0x18] sm:$0xff]
    %v74 = vld [vmem:[#allocation2 + $0x20] sm:$0xff]
    %v75 = vld [vmem:[#allocation2 + $0x28] sm:$0xff]
    %v76 = vld [vmem:[#allocation2 + $0x30] sm:$0xff]
    %v77 = vadd.f32 %v70, %v71
    %v78 = vadd.f32 %v77, %v72
    %v79 = vadd.f32 %v78, %v73
    %v80 = vadd.f32 %v79, %v74
    %v81 = vadd.f32 %v80, %v75
    %vm82 = vcmask 564224
    %v83 = vsel %vm82, %v76, 0.0
    %v84 = vadd.f32 %v81, %v83
    %85 = vadd.xlane.f32.xlu0 %v84
    %v86 = vpop.xlane.xlu0 %85
    %v87 = vmul.f32 %v86, 0.0011947431
    %v88 = vsub.f32 %v70, %v87
    %v89 = vsub.f32 %v71, %v87
    %v90 = vsub.f32 %v72, %v87
    %v91 = vsub.f32 %v73, %v87
    %v92 = vsub.f32 %v74, %v87
    %v93 = vsub.f32 %v75, %v87
    %v94 = vsub.f32 %v76, %v87
    %v95 = vmul.f32 %v88, %v88
    %v96 = vmul.f32 %v89, %v89
    %v97 = vmul.f32 %v90, %v90
    %v98 = vmul.f32 %v91, %v91
    %v99 = vmul.f32 %v92, %v92
    %v100 = vmul.f32 %v93, %v93
    %v101 = vmul.f32 %v94, %v94
    %v102 = vadd.f32 %v95, %v96
    %v103 = vadd.f32 %v102, %v97
    %v104 = vadd.f32 %v103, %v98
    %v105 = vadd.f32 %v104, %v99
    %v106 = vadd.f32 %v105, %v100
    %v107 = vsel %vm82, %v101, 0.0
    %v108 = vadd.f32 %v106, %v107
    %109 = vadd.xlane.f32.xlu0 %v108
    %v110 = vpop.xlane.xlu0 %109
    %v111 = vmul.f32 %v110, 0.0011947431
    %v112 = vadd.f32 %v111, 1e-05
    %v113 = vrsqrt.pop %v112
    %v114 = vmul.f32 %v113, %v112
    %v115 = vmul.f32 %v114, %v113
    %v116 = vmul.f32 0.5, %v115
    %v117 = vsub.f32 1.5, %v116
    %v118 = vmul.f32 %v113, %v117
    %vm119 = vweird.f32 %v112
    %vm120 = vweird.f32 %v113
    %vm121 = vmor %vm119, %vm120
    %v122 = vsel %vm121, %v113, %v118
    %v123 = vpack.c.bf16 %v88, %v88
    %v124 = vpack.c.bf16 %v89, %v89
    %v125 = vpack.c.bf16 %v90, %v90
    %v126 = vpack.c.bf16 %v91, %v91
    %v127 = vpack.c.bf16 %v92, %v92
    %v128 = vpack.c.bf16 %v93, %v93
    %v129 = vpack.c.bf16 %v94, %v94
    %v130 = vld [vmem:[#allocation5] sm:$0xff]
    %v131 = vld [vmem:[#allocation5 + $0x8] sm:$0xff]
    %v132 = vld [vmem:[#allocation5 + $0x10] sm:$0xff]
    %v133 = vld [vmem:[#allocation5 + $0x18] sm:$0xff]
    %v134 = vld [vmem:[#allocation5 + $0x20] sm:$0xff]
    %v135 = vld [vmem:[#allocation5 + $0x28] sm:$0xff]
    %v136 = vld [vmem:[#allocation5 + $0x30] sm:$0xff]
    %v137 = vld [vmem:[#allocation5 + $0x38] sm:$0xff]
    %v138 = vld [vmem:[#allocation5 + $0x40] sm:$0xff]
    %v139 = vld [vmem:[#allocation5 + $0x48] sm:$0xff]
    %v140 = vld [vmem:[#allocation5 + $0x50] sm:$0xff]
    %v141 = vld [vmem:[#allocation5 + $0x58] sm:$0xff]
    %v142 = vld [vmem:[#allocation5 + $0x60] sm:$0xff]
    %v143 = vld [vmem:[#allocation5 + $0x68] sm:$0xff]
    %v144 = vld [vmem:[#allocation5 + $0x70] sm:$0xff]
    %v145 = vld [vmem:[#allocation5 + $0x78] sm:$0xff]
    %v146 = vld [vmem:[#allocation5 + $0x80] sm:$0xff]
    %v147 = vld [vmem:[#allocation5 + $0x88] sm:$0xff]
    %v148 = vld [vmem:[#allocation5 + $0x90] sm:$0xff]
    %v149 = vld [vmem:[#allocation5 + $0x98] sm:$0xff]
    %v150 = vld [vmem:[#allocation5 + $0xa0] sm:$0xff]
    %v151 = vld [vmem:[#allocation5 + $0xa8] sm:$0xff]
    %v152 = vld [vmem:[#allocation5 + $0xb0] sm:$0xff]
    %v153 = vld [vmem:[#allocation5 + $0xb8] sm:$0xff]
    %v154 = vld [vmem:[#allocation5 + $0xc0] sm:$0xff]
    %v155 = vld [vmem:[#allocation5 + $0xc8] sm:$0xff]
    %v156 = vld [vmem:[#allocation5 + $0xd0] sm:$0xff]
    %v157 = vld [vmem:[#allocation5 + $0xd8] sm:$0xff]
    %v158 = vld [vmem:[#allocation5 + $0xe0] sm:$0xff]
    %v159 = vld [vmem:[#allocation5 + $0xe8] sm:$0xff]
    %v160 = vld [vmem:[#allocation5 + $0xf0] sm:$0xff]
    %v161 = vld [vmem:[#allocation5 + $0xf8] sm:$0xff]
    %v162 = vld [vmem:[#allocation5 + $0x100] sm:$0xff]
    %v163 = vld [vmem:[#allocation5 + $0x108] sm:$0xff]
    %v164 = vld [vmem:[#allocation5 + $0x110] sm:$0xff]
    %v165 = vld [vmem:[#allocation5 + $0x118] sm:$0xff]
    %v166 = vld [vmem:[#allocation5 + $0x120] sm:$0xff]
    %v167 = vld [vmem:[#allocation5 + $0x128] sm:$0xff]
    %v168 = vld [vmem:[#allocation5 + $0x130] sm:$0xff]
    %v169 = vld [vmem:[#allocation5 + $0x138] sm:$0xff]
    %v170 = vld [vmem:[#allocation5 + $0x140] sm:$0xff]
    %v171 = vld [vmem:[#allocation5 + $0x148] sm:$0xff]
    %v172 = vld [vmem:[#allocation5 + $0x150] sm:$0xff]
    %v173 = vld [vmem:[#allocation5 + $0x158] sm:$0xff]
    %v174 = vld [vmem:[#allocation5 + $0x160] sm:$0xff]
    %v175 = vld [vmem:[#allocation5 + $0x168] sm:$0xff]
    %v176 = vld [vmem:[#allocation5 + $0x170] sm:$0xff]
    %v177 = vld [vmem:[#allocation5 + $0x178] sm:$0xff]
    %v178 = vld [vmem:[#allocation5 + $0x180] sm:$0xff]
    %v179 = vld [vmem:[#allocation5 + $0x188] sm:$0xff]
    %v180 = vld [vmem:[#allocation5 + $0x190] sm:$0xff]
    %v181 = vld [vmem:[#allocation5 + $0x198] sm:$0xff]
    %v182 = vld [vmem:[#allocation5 + $0x1a0] sm:$0xff]
    %v183 = vld [vmem:[#allocation5 + $0x1a8] sm:$0xff]
    %v184 = vld [vmem:[#allocation5 + $0x1b0] sm:$0xff]
    %v185 = vld [vmem:[#allocation5 + $0x1b8] sm:$0xff]
    %v186 = vld [vmem:[#allocation5 + $0x1c0] sm:$0xff]
    %v187 = vld [vmem:[#allocation5 + $0x1c8] sm:$0xff]
    %v188 = vld [vmem:[#allocation5 + $0x1d0] sm:$0xff]
    %v189 = vld [vmem:[#allocation5 + $0x1d8] sm:$0xff]
    %v190 = vld [vmem:[#allocation5 + $0x1e0] sm:$0xff]
    %v191 = vld [vmem:[#allocation5 + $0x1e8] sm:$0xff]
    %v192 = vld [vmem:[#allocation5 + $0x1f0] sm:$0xff]
    %v193 = vld [vmem:[#allocation5 + $0x1f8] sm:$0xff]
    %v194 = vld [vmem:[#allocation5 + $0x200] sm:$0xff]
    %v195 = vld [vmem:[#allocation5 + $0x208] sm:$0xff]
    %v196 = vld [vmem:[#allocation5 + $0x210] sm:$0xff]
    %v197 = vld [vmem:[#allocation5 + $0x218] sm:$0xff]
    %v198 = vld [vmem:[#allocation5 + $0x220] sm:$0xff]
    %v199 = vld [vmem:[#allocation5 + $0x228] sm:$0xff]
    %v200 = vld [vmem:[#allocation5 + $0x230] sm:$0xff]
    %v201 = vld [vmem:[#allocation5 + $0x238] sm:$0xff]
    %v202 = vld [vmem:[#allocation5 + $0x240] sm:$0xff]
    %v203 = vld [vmem:[#allocation5 + $0x248] sm:$0xff]
    %v204 = vld [vmem:[#allocation5 + $0x250] sm:$0xff]
    %v205 = vld [vmem:[#allocation5 + $0x258] sm:$0xff]
    %v206 = vld [vmem:[#allocation5 + $0x260] sm:$0xff]
    %v207 = vld [vmem:[#allocation5 + $0x268] sm:$0xff]
    %v208 = vld [vmem:[#allocation5 + $0x270] sm:$0xff]
    %v209 = vld [vmem:[#allocation5 + $0x278] sm:$0xff]
    %v210 = vld [vmem:[#allocation5 + $0x280] sm:$0xff]
    %v211 = vld [vmem:[#allocation5 + $0x288] sm:$0xff]
    %v212 = vld [vmem:[#allocation5 + $0x290] sm:$0xff]
    %v213 = vld [vmem:[#allocation5 + $0x298] sm:$0xff]
    %v214 = vld [vmem:[#allocation5 + $0x2a0] sm:$0xff]
    %v215 = vld [vmem:[#allocation5 + $0x2a8] sm:$0xff]
    %v216 = vld [vmem:[#allocation5 + $0x2b0] sm:$0xff]
    %v217 = vld [vmem:[#allocation5 + $0x2b8] sm:$0xff]
    %v218 = vld [vmem:[#allocation5 + $0x2c0] sm:$0xff]
    %v219 = vld [vmem:[#allocation5 + $0x2c8] sm:$0xff]
    %v220 = vld [vmem:[#allocation5 + $0x2d0] sm:$0xff]
    %v221 = vld [vmem:[#allocation5 + $0x2d8] sm:$0xff]
    %v222 = vld [vmem:[#allocation5 + $0x2e0] sm:$0xff]
    %v223 = vld [vmem:[#allocation5 + $0x2e8] sm:$0xff]
    %v224 = vld [vmem:[#allocation5 + $0x2f0] sm:$0xff]
    %v225 = vld [vmem:[#allocation5 + $0x2f8] sm:$0xff]
    %v226 = vld [vmem:[#allocation5 + $0x300] sm:$0xff]
    %v227 = vld [vmem:[#allocation5 + $0x308] sm:$0xff]
    %v228 = vld [vmem:[#allocation5 + $0x310] sm:$0xff]
    %v229 = vld [vmem:[#allocation5 + $0x318] sm:$0xff]
    %v230 = vld [vmem:[#allocation5 + $0x320] sm:$0xff]
    %v231 = vld [vmem:[#allocation5 + $0x328] sm:$0xff]
    %v232 = vld [vmem:[#allocation5 + $0x330] sm:$0xff]
    %v233 = vld [vmem:[#allocation5 + $0x338] sm:$0xff]
    %v234 = vld [vmem:[#allocation5 + $0x340] sm:$0x77]
    %v340 = vunpack.c.l.b16 %v130
    %v341 = vunpack.c.h.b16 %v130
    %v342 = vunpack.c.l.b16 %v131
    %v343 = vunpack.c.h.b16 %v131
    %v344 = vunpack.c.l.b16 %v132
    %v345 = vunpack.c.h.b16 %v132
    %v346 = vunpack.c.l.b16 %v133
    %v347 = vunpack.c.h.b16 %v133
    %v348 = vunpack.c.l.b16 %v134
    %v349 = vunpack.c.h.b16 %v134
    %v350 = vunpack.c.l.b16 %v135
    %v351 = vunpack.c.h.b16 %v135
    %v352 = vunpack.c.l.b16 %v136
    %v353 = vunpack.c.h.b16 %v136
    %v354 = vunpack.c.l.b16 %v137
    %v355 = vunpack.c.h.b16 %v137
    %v356 = vunpack.c.l.b16 %v138
    %v357 = vunpack.c.h.b16 %v138
    %v358 = vunpack.c.l.b16 %v139
    %v359 = vunpack.c.h.b16 %v139
    %v360 = vunpack.c.l.b16 %v140
    %v361 = vunpack.c.h.b16 %v140
    %v362 = vunpack.c.l.b16 %v141
    %v363 = vunpack.c.h.b16 %v141
    %v364 = vunpack.c.l.b16 %v142
    %v365 = vunpack.c.h.b16 %v142
    %v366 = vunpack.c.l.b16 %v143
    %v367 = vunpack.c.h.b16 %v143
    %v368 = vunpack.c.l.b16 %v144
    %v369 = vunpack.c.h.b16 %v144
    %v370 = vunpack.c.l.b16 %v145
    %v371 = vunpack.c.h.b16 %v145
    %v372 = vunpack.c.l.b16 %v146
    %v373 = vunpack.c.h.b16 %v146
    %v374 = vunpack.c.l.b16 %v147
    %v375 = vunpack.c.h.b16 %v147
    %v376 = vunpack.c.l.b16 %v148
    %v377 = vunpack.c.h.b16 %v148
    %v378 = vunpack.c.l.b16 %v149
    %v379 = vunpack.c.h.b16 %v149
    %v380 = vunpack.c.l.b16 %v150
    %v381 = vunpack.c.h.b16 %v150
    %v382 = vunpack.c.l.b16 %v151
    %v383 = vunpack.c.h.b16 %v151
    %v384 = vunpack.c.l.b16 %v152
    %v385 = vunpack.c.h.b16 %v152
    %v386 = vunpack.c.l.b16 %v153
    %v387 = vunpack.c.h.b16 %v153
    %v388 = vunpack.c.l.b16 %v154
    %v389 = vunpack.c.h.b16 %v154
    %v390 = vunpack.c.l.b16 %v155
    %v391 = vunpack.c.h.b16 %v155
    %v392 = vunpack.c.l.b16 %v156
    %v393 = vunpack.c.h.b16 %v156
    %v394 = vunpack.c.l.b16 %v157
    %v395 = vunpack.c.h.b16 %v157
    %v396 = vunpack.c.l.b16 %v158
    %v397 = vunpack.c.h.b16 %v158
    %v398 = vunpack.c.l.b16 %v159
    %v399 = vunpack.c.h.b16 %v159
    %v400 = vunpack.c.l.b16 %v160
    %v401 = vunpack.c.h.b16 %v160
    %v402 = vunpack.c.l.b16 %v161
    %v403 = vunpack.c.h.b16 %v161
    %v404 = vunpack.c.l.b16 %v162
    %v405 = vunpack.c.h.b16 %v162
    %v406 = vunpack.c.l.b16 %v163
    %v407 = vunpack.c.h.b16 %v163
    %v408 = vunpack.c.l.b16 %v164
    %v409 = vunpack.c.h.b16 %v164
    %v410 = vunpack.c.l.b16 %v165
    %v411 = vunpack.c.h.b16 %v165
    %v412 = vunpack.c.l.b16 %v166
    %v413 = vunpack.c.h.b16 %v166
    %v414 = vunpack.c.l.b16 %v167
    %v415 = vunpack.c.h.b16 %v167
    %v416 = vunpack.c.l.b16 %v168
    %v417 = vunpack.c.h.b16 %v168
    %v418 = vunpack.c.l.b16 %v169
    %v419 = vunpack.c.h.b16 %v169
    %v420 = vunpack.c.l.b16 %v170
    %v421 = vunpack.c.h.b16 %v170
    %v422 = vunpack.c.l.b16 %v171
    %v423 = vunpack.c.h.b16 %v171
    %v424 = vunpack.c.l.b16 %v172
    %v425 = vunpack.c.h.b16 %v172
    %v426 = vunpack.c.l.b16 %v173
    %v427 = vunpack.c.h.b16 %v173
    %v428 = vunpack.c.l.b16 %v174
    %v429 = vunpack.c.h.b16 %v174
    %v430 = vunpack.c.l.b16 %v175
    %v431 = vunpack.c.h.b16 %v175
    %v432 = vunpack.c.l.b16 %v176
    %v433 = vunpack.c.h.b16 %v176
    %v434 = vunpack.c.l.b16 %v177
    %v435 = vunpack.c.h.b16 %v177
    %v436 = vunpack.c.l.b16 %v178
    %v437 = vunpack.c.h.b16 %v178
    %v438 = vunpack.c.l.b16 %v179
    %v439 = vunpack.c.h.b16 %v179
    %v440 = vunpack.c.l.b16 %v180
    %v441 = vunpack.c.h.b16 %v180
    %v442 = vunpack.c.l.b16 %v181
    %v443 = vunpack.c.h.b16 %v181
    %v444 = vunpack.c.l.b16 %v182
    %v445 = vunpack.c.h.b16 %v182
    %v446 = vunpack.c.l.b16 %v183
    %v447 = vunpack.c.h.b16 %v183
    %v448 = vunpack.c.l.b16 %v184
    %v449 = vunpack.c.h.b16 %v184
    %v450 = vunpack.c.l.b16 %v185
    %v451 = vunpack.c.h.b16 %v185
    %v452 = vunpack.c.l.b16 %v186
    %v453 = vunpack.c.h.b16 %v186
    %v454 = vunpack.c.l.b16 %v187
    %v455 = vunpack.c.h.b16 %v187
    %v456 = vunpack.c.l.b16 %v188
    %v457 = vunpack.c.h.b16 %v188
    %v458 = vunpack.c.l.b16 %v189
    %v459 = vunpack.c.h.b16 %v189
    %v460 = vunpack.c.l.b16 %v190
    %v461 = vunpack.c.h.b16 %v190
    %v462 = vunpack.c.l.b16 %v191
    %v463 = vunpack.c.h.b16 %v191
    %v464 = vunpack.c.l.b16 %v192
    %v465 = vunpack.c.h.b16 %v192
    %v466 = vunpack.c.l.b16 %v193
    %v467 = vunpack.c.h.b16 %v193
    %v468 = vunpack.c.l.b16 %v194
    %v469 = vunpack.c.h.b16 %v194
    %v470 = vunpack.c.l.b16 %v195
    %v471 = vunpack.c.h.b16 %v195
    %v472 = vunpack.c.l.b16 %v196
    %v473 = vunpack.c.h.b16 %v196
    %v474 = vunpack.c.l.b16 %v197
    %v475 = vunpack.c.h.b16 %v197
    %v476 = vunpack.c.l.b16 %v198
    %v477 = vunpack.c.h.b16 %v198
    %v478 = vunpack.c.l.b16 %v199
    %v479 = vunpack.c.h.b16 %v199
    %v480 = vunpack.c.l.b16 %v200
    %v481 = vunpack.c.h.b16 %v200
    %v482 = vunpack.c.l.b16 %v201
    %v483 = vunpack.c.h.b16 %v201
    %v484 = vunpack.c.l.b16 %v202
    %v485 = vunpack.c.h.b16 %v202
    %v486 = vunpack.c.l.b16 %v203
    %v487 = vunpack.c.h.b16 %v203
    %v488 = vunpack.c.l.b16 %v204
    %v489 = vunpack.c.h.b16 %v204
    %v490 = vunpack.c.l.b16 %v205
    %v491 = vunpack.c.h.b16 %v205
    %v492 = vunpack.c.l.b16 %v206
    %v493 = vunpack.c.h.b16 %v206
    %v494 = vunpack.c.l.b16 %v207
    %v495 = vunpack.c.h.b16 %v207
    %v496 = vunpack.c.l.b16 %v208
    %v497 = vunpack.c.h.b16 %v208
    %v498 = vunpack.c.l.b16 %v209
    %v499 = vunpack.c.h.b16 %v209
    %v500 = vunpack.c.l.b16 %v210
    %v501 = vunpack.c.h.b16 %v210
    %v502 = vunpack.c.l.b16 %v211
    %v503 = vunpack.c.h.b16 %v211
    %v504 = vunpack.c.l.b16 %v212
    %v505 = vunpack.c.h.b16 %v212
    %v506 = vunpack.c.l.b16 %v213
    %v507 = vunpack.c.h.b16 %v213
    %v508 = vunpack.c.l.b16 %v214
    %v509 = vunpack.c.h.b16 %v214
    %v510 = vunpack.c.l.b16 %v215
    %v511 = vunpack.c.h.b16 %v215
    %v512 = vunpack.c.l.b16 %v216
    %v513 = vunpack.c.h.b16 %v216
    %v514 = vunpack.c.l.b16 %v217
    %v515 = vunpack.c.h.b16 %v217
    %v516 = vunpack.c.l.b16 %v218
    %v517 = vunpack.c.h.b16 %v218
    %v518 = vunpack.c.l.b16 %v219
    %v519 = vunpack.c.h.b16 %v219
    %v520 = vunpack.c.l.b16 %v220
    %v521 = vunpack.c.h.b16 %v220
    %v522 = vunpack.c.l.b16 %v221
    %v523 = vunpack.c.h.b16 %v221
    %v524 = vunpack.c.l.b16 %v222
    %v525 = vunpack.c.h.b16 %v222
    %v526 = vunpack.c.l.b16 %v223
    %v527 = vunpack.c.h.b16 %v223
    %v528 = vunpack.c.l.b16 %v224
    %v529 = vunpack.c.h.b16 %v224
    %v530 = vunpack.c.l.b16 %v225
    %v531 = vunpack.c.h.b16 %v225
    %v532 = vunpack.c.l.b16 %v226
    %v533 = vunpack.c.h.b16 %v226
    %v534 = vunpack.c.l.b16 %v227
    %v535 = vunpack.c.h.b16 %v227
    %v536 = vunpack.c.l.b16 %v228
    %v537 = vunpack.c.h.b16 %v228
    %v538 = vunpack.c.l.b16 %v229
    %v539 = vunpack.c.h.b16 %v229
    %v540 = vunpack.c.l.b16 %v230
    %v541 = vunpack.c.h.b16 %v230
    %v542 = vunpack.c.l.b16 %v231
    %v543 = vunpack.c.h.b16 %v231
    %v544 = vunpack.c.l.b16 %v232
    %v545 = vunpack.c.h.b16 %v232
    %v546 = vunpack.c.l.b16 %v233
    %v547 = vunpack.c.h.b16 %v233
    %v548 = vunpack.c.l.b16 %v234
    %v549 = vunpack.c.h.b16 %v234
    %v550 = vpack.c.b16 %v342, %v340
    %v551 = vpack.c.b16 %v343, %v341
    %v552 = vpack.c.b16 %v346, %v344
    %v553 = vpack.c.b16 %v347, %v345
    %v554 = vpack.c.b16 %v350, %v348
    %v555 = vpack.c.b16 %v351, %v349
    %v556 = vpack.c.b16 %v354, %v352
    %v557 = vpack.c.b16 %v355, %v353
    %v558 = vpack.c.b16 %v358, %v356
    %v559 = vpack.c.b16 %v359, %v357
    %v560 = vpack.c.b16 %v362, %v360
    %v561 = vpack.c.b16 %v363, %v361
    %v562 = vpack.c.b16 %v366, %v364
    %v563 = vpack.c.b16 %v367, %v365
    %v564 = vpack.c.b16 %v370, %v368
    %v565 = vpack.c.b16 %v371, %v369
    %v566 = vpack.c.b16 %v374, %v372
    %v567 = vpack.c.b16 %v375, %v373
    %v568 = vpack.c.b16 %v378, %v376
    %v569 = vpack.c.b16 %v379, %v377
    %v570 = vpack.c.b16 %v382, %v380
    %v571 = vpack.c.b16 %v383, %v381
    %v572 = vpack.c.b16 %v386, %v384
    %v573 = vpack.c.b16 %v387, %v385
    %v574 = vpack.c.b16 %v390, %v388
    %v575 = vpack.c.b16 %v391, %v389
    %v576 = vpack.c.b16 %v394, %v392
    %v577 = vpack.c.b16 %v395, %v393
    %v578 = vpack.c.b16 %v398, %v396
    %v579 = vpack.c.b16 %v399, %v397
    %v580 = vpack.c.b16 %v402, %v400
    %v581 = vpack.c.b16 %v403, %v401
    %v582 = vpack.c.b16 %v406, %v404
    %v583 = vpack.c.b16 %v407, %v405
    %v584 = vpack.c.b16 %v410, %v408
    %v585 = vpack.c.b16 %v411, %v409
    %v586 = vpack.c.b16 %v414, %v412
    %v587 = vpack.c.b16 %v415, %v413
    %v588 = vpack.c.b16 %v418, %v416
    %v589 = vpack.c.b16 %v419, %v417
    %v590 = vpack.c.b16 %v422, %v420
    %v591 = vpack.c.b16 %v423, %v421
    %v592 = vpack.c.b16 %v426, %v424
    %v593 = vpack.c.b16 %v427, %v425
    %v594 = vpack.c.b16 %v430, %v428
    %v595 = vpack.c.b16 %v431, %v429
    %v596 = vpack.c.b16 %v434, %v432
    %v597 = vpack.c.b16 %v435, %v433
    %v598 = vpack.c.b16 %v438, %v436
    %v599 = vpack.c.b16 %v439, %v437
    %v600 = vpack.c.b16 %v442, %v440
    %v601 = vpack.c.b16 %v443, %v441
    %v602 = vpack.c.b16 %v446, %v444
    %v603 = vpack.c.b16 %v447, %v445
    %v604 = vpack.c.b16 %v450, %v448
    %v605 = vpack.c.b16 %v451, %v449
    %v606 = vpack.c.b16 %v454, %v452
    %v607 = vpack.c.b16 %v455, %v453
    %v608 = vpack.c.b16 %v458, %v456
    %v609 = vpack.c.b16 %v459, %v457
    %v610 = vpack.c.b16 %v462, %v460
    %v611 = vpack.c.b16 %v463, %v461
    %v612 = vpack.c.b16 %v466, %v464
    %v613 = vpack.c.b16 %v467, %v465
    %v614 = vpack.c.b16 %v470, %v468
    %v615 = vpack.c.b16 %v471, %v469
    %v616 = vpack.c.b16 %v474, %v472
    %v617 = vpack.c.b16 %v475, %v473
    %v618 = vpack.c.b16 %v478, %v476
    %v619 = vpack.c.b16 %v479, %v477
    %v620 = vpack.c.b16 %v482, %v480
    %v621 = vpack.c.b16 %v483, %v481
    %v622 = vpack.c.b16 %v486, %v484
    %v623 = vpack.c.b16 %v487, %v485
    %v624 = vpack.c.b16 %v490, %v488
    %v625 = vpack.c.b16 %v491, %v489
    %v626 = vpack.c.b16 %v494, %v492
    %v627 = vpack.c.b16 %v495, %v493
    %v628 = vpack.c.b16 %v498, %v496
    %v629 = vpack.c.b16 %v499, %v497
    %v630 = vpack.c.b16 %v502, %v500
    %v631 = vpack.c.b16 %v503, %v501
    %v632 = vpack.c.b16 %v506, %v504
    %v633 = vpack.c.b16 %v507, %v505
    %v634 = vpack.c.b16 %v510, %v508
    %v635 = vpack.c.b16 %v511, %v509
    %v636 = vpack.c.b16 %v514, %v512
    %v637 = vpack.c.b16 %v515, %v513
    %v638 = vpack.c.b16 %v518, %v516
    %v639 = vpack.c.b16 %v519, %v517
    %v640 = vpack.c.b16 %v522, %v520
    %v641 = vpack.c.b16 %v523, %v521
    %v642 = vpack.c.b16 %v526, %v524
    %v643 = vpack.c.b16 %v527, %v525
    %v644 = vpack.c.b16 %v530, %v528
    %v645 = vpack.c.b16 %v531, %v529
    %v646 = vpack.c.b16 %v534, %v532
    %v647 = vpack.c.b16 %v535, %v533
    %v648 = vpack.c.b16 %v538, %v536
    %v649 = vpack.c.b16 %v539, %v537
    %v650 = vpack.c.b16 %v542, %v540
    %v651 = vpack.c.b16 %v543, %v541
    %v652 = vpack.c.b16 %v546, %v544
    %v653 = vpack.c.b16 %v547, %v545
    %v654 = vpack.c.b16 %v548, %v548
    %v655 = vpack.c.b16 %v549, %v549
    %v761 = vsel %vm82, %v129, 0
    %vm763 = vcmask 1041408
    %vm764 = vcmask 1042432
    %v765 = vsel %vm763, 4294967295, 65535
    %v766 = vsel %vm764, %v765, 0
    %v768 = vand.u32 %v654, %v766
    %v771 = vand.u32 %v655, %v766
    %773 = vmatpush.bf16.msra.mxu0 %v564
    %774 = vmatpush.bf16.msra.mxu0 %v562
    %775 = vmatpush.bf16.msra.mxu0 %v560
    %776 = vmatpush.bf16.msra.mxu0 %v558
    %777 = vmatpush.bf16.msra.mxu0 %v556
    %778 = vmatpush.bf16.msra.mxu0 %v554
    %779 = vmatpush.bf16.msra.mxu0 %v552
    %780 = vmatpush.bf16.msra.mxu0 %v550
    %781 = vmatmul.bf16.gmra.mxu0 %v123
    %v782 = vpop.f32.mrf.mxu0
    %v783 = vadd.f32 0.0, %v782
    %v784 = vpop.f32.mrf.mxu0
    %785 = vdwg.mxu0
    %786 = vmatpush.bf16.msra.mxu0 %v580
    %787 = vmatpush.bf16.msra.mxu0 %v578
    %788 = vmatpush.bf16.msra.mxu0 %v576
    %789 = vmatpush.bf16.msra.mxu0 %v574
    %790 = vmatpush.bf16.msra.mxu0 %v572
    %791 = vmatpush.bf16.msra.mxu0 %v570
    %792 = vmatpush.bf16.msra.mxu0 %v568
    %793 = vmatpush.bf16.msra.mxu0 %v566
    %794 = vmatmul.bf16.gmra.mxu0 %v124
    %v795 = vpop.f32.mrf.mxu0
    %v796 = vadd.f32 %v783, %v795
    %v797 = vpop.f32.mrf.mxu0
    %798 = vdwg.mxu0
    %799 = vmatpush.bf16.msra.mxu0 %v596
    %800 = vmatpush.bf16.msra.mxu0 %v594
    %801 = vmatpush.bf16.msra.mxu0 %v592
    %802 = vmatpush.bf16.msra.mxu0 %v590
    %803 = vmatpush.bf16.msra.mxu0 %v588
    %804 = vmatpush.bf16.msra.mxu0 %v586
    %805 = vmatpush.bf16.msra.mxu0 %v584
    %806 = vmatpush.bf16.msra.mxu0 %v582
    %807 = vmatmul.bf16.gmra.mxu0 %v125
    %v808 = vpop.f32.mrf.mxu0
    %v809 = vadd.f32 %v796, %v808
    %v810 = vpop.f32.mrf.mxu0
    %811 = vdwg.mxu0
    %812 = vmatpush.bf16.msra.mxu0 %v612
    %813 = vmatpush.bf16.msra.mxu0 %v610
    %814 = vmatpush.bf16.msra.mxu0 %v608
    %815 = vmatpush.bf16.msra.mxu0 %v606
    %816 = vmatpush.bf16.msra.mxu0 %v604
    %817 = vmatpush.bf16.msra.mxu0 %v602
    %818 = vmatpush.bf16.msra.mxu0 %v600
    %819 = vmatpush.bf16.msra.mxu0 %v598
    %820 = vmatmul.bf16.gmra.mxu0 %v126
    %v821 = vpop.f32.mrf.mxu0
    %v822 = vadd.f32 %v809, %v821
    %v823 = vpop.f32.mrf.mxu0
    %824 = vdwg.mxu0
    %825 = vmatpush.bf16.msra.mxu0 %v628
    %826 = vmatpush.bf16.msra.mxu0 %v626
    %827 = vmatpush.bf16.msra.mxu0 %v624
    %828 = vmatpush.bf16.msra.mxu0 %v622
    %829 = vmatpush.bf16.msra.mxu0 %v620
    %830 = vmatpush.bf16.msra.mxu0 %v618
    %831 = vmatpush.bf16.msra.mxu0 %v616
    %832 = vmatpush.bf16.msra.mxu0 %v614
    %833 = vmatmul.bf16.gmra.mxu0 %v127
    %v834 = vpop.f32.mrf.mxu0
    %v835 = vadd.f32 %v822, %v834
    %v836 = vpop.f32.mrf.mxu0
    %837 = vdwg.mxu0
    %838 = vmatpush.bf16.msra.mxu0 %v644
    %839 = vmatpush.bf16.msra.mxu0 %v642
    %840 = vmatpush.bf16.msra.mxu0 %v640
    %841 = vmatpush.bf16.msra.mxu0 %v638
    %842 = vmatpush.bf16.msra.mxu0 %v636
    %843 = vmatpush.bf16.msra.mxu0 %v634
    %844 = vmatpush.bf16.msra.mxu0 %v632
    %845 = vmatpush.bf16.msra.mxu0 %v630
    %846 = vmatmul.bf16.gmra.mxu0 %v128
    %v847 = vpop.f32.mrf.mxu0
    %v848 = vadd.f32 %v835, %v847
    %v849 = vpop.f32.mrf.mxu0
    %850 = vdwg.mxu0
    %851 = vmatpush.bf16.msra.mxu0 0
    %852 = vmatpush.bf16.msra.mxu0 0
    %853 = vmatpush.bf16.msra.mxu0 0
    %854 = vmatpush.bf16.msra.mxu0 %v768
    %855 = vmatpush.bf16.msra.mxu0 %v652
    %856 = vmatpush.bf16.msra.mxu0 %v650
    %857 = vmatpush.bf16.msra.mxu0 %v648
    %858 = vmatpush.bf16.msra.mxu0 %v646
    %859 = vmatmul.bf16.gmra.mxu0 %v761
    %v860 = vpop.f32.mrf.mxu0
    %v861 = vadd.f32 %v848, %v860
    %v862 = vpop.f32.mrf.mxu0
    %863 = vdwg.mxu0
    %864 = vmatpush.bf16.msra.mxu0 %v565
    %865 = vmatpush.bf16.msra.mxu0 %v563
    %866 = vmatpush.bf16.msra.mxu0 %v561
    %867 = vmatpush.bf16.msra.mxu0 %v559
    %868 = vmatpush.bf16.msra.mxu0 %v557
    %869 = vmatpush.bf16.msra.mxu0 %v555
    %870 = vmatpush.bf16.msra.mxu0 %v553
    %871 = vmatpush.bf16.msra.mxu0 %v551
    %872 = vmatmul.bf16.gmra.mxu0 %v123
    %v873 = vpop.f32.mrf.mxu0
    %v874 = vadd.f32 0.0, %v873
    %v875 = vpop.f32.mrf.mxu0
    %876 = vdwg.mxu0
    %877 = vmatpush.bf16.msra.mxu0 %v581
    %878 = vmatpush.bf16.msra.mxu0 %v579
    %879 = vmatpush.bf16.msra.mxu0 %v577
    %880 = vmatpush.bf16.msra.mxu0 %v575
    %881 = vmatpush.bf16.msra.mxu0 %v573
    %882 = vmatpush.bf16.msra.mxu0 %v571
    %883 = vmatpush.bf16.msra.mxu0 %v569
    %884 = vmatpush.bf16.msra.mxu0 %v567
    %885 = vmatmul.bf16.gmra.mxu0 %v124
    %v886 = vpop.f32.mrf.mxu0
    %v887 = vadd.f32 %v874, %v886
    %v888 = vpop.f32.mrf.mxu0
    %889 = vdwg.mxu0
    %890 = vmatpush.bf16.msra.mxu0 %v597
    %891 = vmatpush.bf16.msra.mxu0 %v595
    %892 = vmatpush.bf16.msra.mxu0 %v593
    %893 = vmatpush.bf16.msra.mxu0 %v591
    %894 = vmatpush.bf16.msra.mxu0 %v589
    %895 = vmatpush.bf16.msra.mxu0 %v587
    %896 = vmatpush.bf16.msra.mxu0 %v585
    %897 = vmatpush.bf16.msra.mxu0 %v583
    %898 = vmatmul.bf16.gmra.mxu0 %v125
    %v899 = vpop.f32.mrf.mxu0
    %v900 = vadd.f32 %v887, %v899
    %v901 = vpop.f32.mrf.mxu0
    %902 = vdwg.mxu0
    %903 = vmatpush.bf16.msra.mxu0 %v613
    %904 = vmatpush.bf16.msra.mxu0 %v611
    %905 = vmatpush.bf16.msra.mxu0 %v609
    %906 = vmatpush.bf16.msra.mxu0 %v607
    %907 = vmatpush.bf16.msra.mxu0 %v605
    %908 = vmatpush.bf16.msra.mxu0 %v603
    %909 = vmatpush.bf16.msra.mxu0 %v601
    %910 = vmatpush.bf16.msra.mxu0 %v599
    %911 = vmatmul.bf16.gmra.mxu0 %v126
    %v912 = vpop.f32.mrf.mxu0
    %v913 = vadd.f32 %v900, %v912
    %v914 = vpop.f32.mrf.mxu0
    %915 = vdwg.mxu0
    %916 = vmatpush.bf16.msra.mxu0 %v629
    %917 = vmatpush.bf16.msra.mxu0 %v627
    %918 = vmatpush.bf16.msra.mxu0 %v625
    %919 = vmatpush.bf16.msra.mxu0 %v623
    %920 = vmatpush.bf16.msra.mxu0 %v621
    %921 = vmatpush.bf16.msra.mxu0 %v619
    %922 = vmatpush.bf16.msra.mxu0 %v617
    %923 = vmatpush.bf16.msra.mxu0 %v615
    %924 = vmatmul.bf16.gmra.mxu0 %v127
    %v925 = vpop.f32.mrf.mxu0
    %v926 = vadd.f32 %v913, %v925
    %v927 = vpop.f32.mrf.mxu0
    %928 = vdwg.mxu0
    %929 = vmatpush.bf16.msra.mxu0 %v645
    %930 = vmatpush.bf16.msra.mxu0 %v643
    %931 = vmatpush.bf16.msra.mxu0 %v641
    %932 = vmatpush.bf16.msra.mxu0 %v639
    %933 = vmatpush.bf16.msra.mxu0 %v637
    %934 = vmatpush.bf16.msra.mxu0 %v635
    %935 = vmatpush.bf16.msra.mxu0 %v633
    %936 = vmatpush.bf16.msra.mxu0 %v631
    %937 = vmatmul.bf16.gmra.mxu0 %v128
    %v938 = vpop.f32.mrf.mxu0
    %v939 = vadd.f32 %v926, %v938
    %v940 = vpop.f32.mrf.mxu0
    %941 = vdwg.mxu0
    %942 = vmatpush.bf16.msra.mxu0 0
    %943 = vmatpush.bf16.msra.mxu0 0
    %944 = vmatpush.bf16.msra.mxu0 0
    %945 = vmatpush.bf16.msra.mxu0 %v771
    %946 = vmatpush.bf16.msra.mxu0 %v653
    %947 = vmatpush.bf16.msra.mxu0 %v651
    %948 = vmatpush.bf16.msra.mxu0 %v649
    %949 = vmatpush.bf16.msra.mxu0 %v647
    %950 = vmatmul.bf16.gmra.mxu0 %v761
    %v951 = vpop.f32.mrf.mxu0
    %v952 = vadd.f32 %v939, %v951
    %v953 = vpop.f32.mrf.mxu0
    %954 = vdwg.mxu0
    %v955 = vmul.f32 %v122, %v861
    %v956 = vld [vmem:[%s3] sm:$0x1]
    %v958 = vperm.slane %v956, 0
    %v960 = vadd.f32 %v955, %v958
    %v961 = vmul.f32 %v960, 0.5
    %v962 = vmul.f32 %v960, 0.044715
    %v963 = vmul.f32 %v962, %v960
    %v964 = vmul.f32 %v963, %v960
    %v965 = vadd.f32 %v960, %v964
    %v966 = vmul.f32 %v965, 0.7978846
    %v967 = vtanh.pop %v966
    %v968 = vadd.f32 %v967, 1.0
    %v969 = vmul.f32 %v961, %v968
    %v970 = vpack.c.bf16 %v969, %v969
    %v971 = vld [vmem:[#allocation7] sm:$0xf]
    %v972 = vld [vmem:[#allocation7 + $0x4] sm:$0xf]
    %v973 = vld [vmem:[#allocation7 + $0x8] sm:$0xf]
    %v974 = vld [vmem:[#allocation7 + $0xc] sm:$0xf]
    %v975 = vld [vmem:[#allocation7 + $0x10] sm:$0xf]
    %v976 = vld [vmem:[#allocation7 + $0x14] sm:$0xf]
    %v977 = vld [vmem:[#allocation7 + $0x18] sm:$0xf]
    %v978 = vld [vmem:[#allocation7 + $0x1c] sm:$0xf]
    %v979 = vld [vmem:[#allocation7 + $0x20] sm:$0xf]
    %v980 = vld [vmem:[#allocation7 + $0x24] sm:$0xf]
    %v981 = vld [vmem:[#allocation7 + $0x28] sm:$0xf]
    %v982 = vld [vmem:[#allocation7 + $0x2c] sm:$0xf]
    %v983 = vld [vmem:[#allocation7 + $0x30] sm:$0xf]
    %v984 = vld [vmem:[#allocation7 + $0x34] sm:$0xf]
    %v985 = vld [vmem:[#allocation7 + $0x38] sm:$0xf]
    %v986 = vld [vmem:[#allocation7 + $0x3c] sm:$0xf]
    %v1003 = vunpack.c.l.b16 %v971
    %v1004 = vunpack.c.l.b16 %v972
    %v1005 = vunpack.c.l.b16 %v973
    %v1006 = vunpack.c.l.b16 %v974
    %v1007 = vunpack.c.l.b16 %v975
    %v1008 = vunpack.c.l.b16 %v976
    %v1009 = vunpack.c.l.b16 %v977
    %v1010 = vunpack.c.l.b16 %v978
    %v1011 = vunpack.c.l.b16 %v979
    %v1012 = vunpack.c.l.b16 %v980
    %v1013 = vunpack.c.l.b16 %v981
    %v1014 = vunpack.c.l.b16 %v982
    %v1015 = vunpack.c.l.b16 %v983
    %v1016 = vunpack.c.l.b16 %v984
    %v1017 = vunpack.c.l.b16 %v985
    %v1018 = vunpack.c.l.b16 %v986
    %v1019 = vpack.c.b16 %v1004, %v1003
    %v1020 = vpack.c.b16 %v1006, %v1005
    %v1021 = vpack.c.b16 %v1008, %v1007
    %v1022 = vpack.c.b16 %v1010, %v1009
    %v1023 = vpack.c.b16 %v1012, %v1011
    %v1024 = vpack.c.b16 %v1014, %v1013
    %v1025 = vpack.c.b16 %v1016, %v1015
    %v1026 = vpack.c.b16 %v1018, %v1017
    %1035 = vmatpush.bf16.msra.mxu0 %v1026
    %1036 = vmatpush.bf16.msra.mxu0 %v1025
    %1037 = vmatpush.bf16.msra.mxu0 %v1024
    %1038 = vmatpush.bf16.msra.mxu0 %v1023
    %1039 = vmatpush.bf16.msra.mxu0 %v1022
    %1040 = vmatpush.bf16.msra.mxu0 %v1021
    %1041 = vmatpush.bf16.msra.mxu0 %v1020
    %1042 = vmatpush.bf16.msra.mxu0 %v1019
    %1043 = vmatmul.bf16.gmra.mxu0 %v970
    %v1044 = vpop.f32.mrf.mxu0
    %v1045 = vadd.f32 0.0, %v1044
    %v1046 = vpop.f32.mrf.mxu0
    %1047 = vdwg.mxu0
    %v1048 = vld [vmem:[%s4] sm:$0x1]
    %v1050 = vperm.slane %v1048, 0
    %v1052 = vmul.f32 %v87, %v1050
    %v1053 = vadd.f32 %v952, %v1052
    %v1054 = vadd.f32 %v1053, %v1045
    %v1055 = vld [vmem:[%s5] sm:$0x1]
    %v1057 = vperm.slane %v1055, 0
    %v1059 = vadd.f32 %v1054, %v1057
    %vm1060 = vcmask 261120
    %1061 = vst.msk [vmem:[#allocation8] sm:$0xff] %vm1060, %v1059
    // Predicated region
    $region38: #{tpu_custom_call.1} parent=1 // pred_check
      _
    $region39: #{tpu_custom_call.1} parent=1 // pred_check_branch
      %1063 = sbr.rel (0) target = $region41
    $region40: #{tpu_custom_call.1} parent=1 // pred_region
      %1065 = vsyncadd [#allocation4], 0
      %s1067 = sshll.u32 [#allocation8], 4
      %s1068 = int_to_ptr.vmem [resolvable:$true] %s1067
      %s1069 = sshll.u32 %s6, 4
      %s1070 = int_to_ptr.hbm [resolvable:$true] %s1069
      %1072 = dma.vmem_to_hbm [thread:$0]  %s1068, 128, %s1070, [#allocation4]
    $region41: #{tpu_custom_call.1} parent=1 // pred_fallthru
      _
    // Predicated region
    $region42: #{tpu_custom_call.1} parent=1 // pred_check
      _
    $region43: #{tpu_custom_call.1} parent=1 // pred_check_branch
      %1074 = sbr.rel (0) target = $region45
    $region44: #{tpu_custom_call.1} parent=1 // pred_region
      %1076 = dma.done [#allocation4], 128
    $region45: #{tpu_custom_call.1} parent=1 // pred_fallthru
      _
    %1077 = vsyncpa [#allocation3], 1
    %1078 = vsyncpa [#allocation6], 1
    %1079 = vsyncpa [#allocation4], 1

// kernel: tpu_custom_call.1
$region0: #{tpu_custom_call.1}
  #allocation0 [shape = 'u32[]', space=smem, size = 0x4, offset = 0x4, fixed_abs, tag = 'smem constant byte address 0x4 - core index']
  #allocation1 [shape = 'u32[72,128]{1,0:T(1,128)}', space=vmem, size = 0x9000, scoped, tag = 'internal scratch']
  %s0 = inlined_call_operand.hbm [shape: f32[8,837], index: 0, kind: input, shape index: {}]
  %s1 = inlined_call_operand.hbm [shape: bf16[837,256], index: 1, kind: input, shape index: {}]
  %s2 = inlined_call_operand.hbm [shape: bf16[128,128], index: 2, kind: input, shape index: {}]
  %s3 = inlined_call_operand.vmem [shape: f32[1,128], index: 3, kind: input, shape index: {}]
  %s4 = inlined_call_operand.vmem [shape: f32[1,128], index: 4, kind: input, shape index: {}]
  %s5 = inlined_call_operand.vmem [shape: f32[1,128], index: 5, kind: input, shape index: {}]
  %s6 = inlined_call_operand.hbm [shape: f32[8,32], index: 6, kind: output, shape index: {}]
  %s7 = sld [smem:[#allocation0]]
  $region46: #{tpu_custom_call.1} parent=0
    _
  %s9 = ssub.s32 1, %s7
  %s10 = scalar_select 0, %s9, %s7
  $region1: #{tpu_custom_call.1} parent=0
    #allocation2 [shape = 'u8[28672]{0}', space=vmem, size = 0x7000, scoped, tag = 'input window, operand 0, single buffered']
    #allocation3 [shape = 's32[1]{0}', space=sflag, size = 0x4, scoped, tag = 'scoped memory for tpu_custom_call.1']
    #allocation4 [shape = 's32[1]{0}', space=sflag, size = 0x4, scoped, tag = 'scoped memory for tpu_custom_call.1']
    #allocation5 [shape = 'u8[430080]{0}', space=vmem, size = 0x69000, scoped, tag = 'input window, operand 1, single buffered']
    #allocation6 [shape = 's32[1]{0}', space=sflag, size = 0x4, scoped, tag = 'scoped memory for tpu_custom_call.1']
    #allocation7 [shape = 'u8[32768]{0}', space=vmem, size = 0x8000, scoped, tag = 'input window, operand 2, single buffered']
    #allocation8 [shape = 'u8[4096]{0}', space=vmem, size = 0x1000, scoped, tag = 'output window, operand 0, single buffered']
    %11 = vsyncpa [#allocation3], 0
    %12 = vsyncpa [#allocation6], 0
    %13 = vsyncpa [#allocation4], 0
    // Predicated region
    $region2: #{tpu_custom_call.1} parent=1 // pred_check
      _
    $region3: #{tpu_custom_call.1} parent=1 // pred_check_branch
      %15 = sbr.rel (0) target = $region5
    $region4: #{tpu_custom_call.1} parent=1 // pred_region
      %17 = vsyncadd [#allocation3], 0
      %s19 = sshll.u32 %s0, 4
      %s20 = int_to_ptr.hbm [resolvable:$true] %s19
      %s21 = sshll.u32 [#allocation2], 4
      %s22 = int_to_ptr.vmem [resolvable:$true] %s21
      %24 = dma.hbm_to_vmem [thread:$0]  %s20, 896, %s22, [#allocation3]
    $region5: #{tpu_custom_call.1} parent=1 // pred_fallthru
      _
    // Predicated region
    $region6: #{tpu_custom_call.1} parent=1 // pred_check
      _
    $region7: #{tpu_custom_call.1} parent=1 // pred_check_branch
      %26 = sbr.rel (0) target = $region9
    $region8: #{tpu_custom_call.1} parent=1 // pred_region
      %28 = vsyncadd [#allocation6], 0
      %s29 = sshll.u32 %s1, 4
      %s30 = int_to_ptr.hbm [resolvable:$true] %s29
      %s31 = sshll.u32 [#allocation5], 4
      %s32 = int_to_ptr.vmem [resolvable:$true] %s31
      %37 = dma.hbm_to_vmem [thread:$0]  %s30, 13440, %s32, [#allocation6], 128, 128, 8
    $region9: #{tpu_custom_call.1} parent=1 // pred_fallthru
      _
    // Predicated region
    $region10: #{tpu_custom_call.1} parent=1 // pred_check
      _
    $region11: #{tpu_custom_call.1} parent=1 // pred_check_branch
      %39 = sbr.rel (0) target = $region13
    $region12: #{tpu_custom_call.1} parent=1 // pred_region
      %41 = vsyncadd [#allocation6], 0
      %s42 = sshll.u32 %s2, 4
      %s43 = int_to_ptr.hbm [resolvable:$true] %s42
      %s44 = sshll.u32 [#allocation7], 4
      %s45 = int_to_ptr.vmem [resolvable:$true] %s44
      %50 = dma.hbm_to_vmem [thread:$0]  %s43, 1024, %s45, [#allocation6], 64, 64, 4
    $region13: #{tpu_custom_call.1} parent=1 // pred_fallthru
      _
    // Predicated region
    $region14: #{tpu_custom_call.1} parent=1 // pred_check
      _
    $region15: #{tpu_custom_call.1} parent=1 // pred_check_branch
      %52 = sbr.rel (0) target = $region17
    $region16: #{tpu_custom_call.1} parent=1 // pred_region
      _
    $region17: #{tpu_custom_call.1} parent=1 // pred_fallthru
      _
    // Predicated region
    $region18: #{tpu_custom_call.1} parent=1 // pred_check
      _
    $region19: #{tpu_custom_call.1} parent=1 // pred_check_branch
      %54 = sbr.rel (0) target = $region21
    $region20: #{tpu_custom_call.1} parent=1 // pred_region
      _
    $region21: #{tpu_custom_call.1} parent=1 // pred_fallthru
      _
    // Predicated region
    $region22: #{tpu_custom_call.1} parent=1 // pred_check
      _
    $region23: #{tpu_custom_call.1} parent=1 // pred_check_branch
      %56 = sbr.rel (0) target = $region25
    $region24: #{tpu_custom_call.1} parent=1 // pred_region
      _
    $region25: #{tpu_custom_call.1} parent=1 // pred_fallthru
      _
    // Predicated region
    $region26: #{tpu_custom_call.1} parent=1 // pred_check
      _
    $region27: #{tpu_custom_call.1} parent=1 // pred_check_branch
      %58 = sbr.rel (0) target = $region29
    $region28: #{tpu_custom_call.1} parent=1 // pred_region
      %60 = dma.done [#allocation3], 896
    $region29: #{tpu_custom_call.1} parent=1 // pred_fallthru
      _
    // Predicated region
    $region30: #{tpu_custom_call.1} parent=1 // pred_check
      _
    $region31: #{tpu_custom_call.1} parent=1 // pred_check_branch
      %62 = sbr.rel (0) target = $region33
    $region32: #{tpu_custom_call.1} parent=1 // pred_region
      %64 = dma.done [#allocation6], 13440
    $region33: #{tpu_custom_call.1} parent=1 // pred_fallthru
      _
    // Predicated region
    $region34: #{tpu_custom_call.1} parent=1 // pred_check
      _
    $region35: #{tpu_custom_call.1} parent=1 // pred_check_branch
      %66 = sbr.rel (0) target = $region37
    $region36: #{tpu_custom_call.1} parent=1 // pred_region
      %68 = dma.done [#allocation6], 1024
    $region37: #{tpu_custom_call.1} parent=1 // pred_fallthru
      _
    %v70 = vld [vmem:[#allocation2] sm:$0xff]
    %v71 = vld [vmem:[#allocation2 + $0x8] sm:$0xff]
    %v72 = vld [vmem:[#allocation2 + $0x10] sm:$0xff]
    %v73 = vld [vmem:[#allocation2 + $0x18] sm:$0xff]
    %v74 = vld [vmem:[#allocation2 + $0x20] sm:$0xff]
    %v75 = vld [vmem:[#allocation2 + $0x28] sm:$0xff]
    %v76 = vld [vmem:[#allocation2 + $0x30] sm:$0xff]
    %v77 = vadd.f32 %v70, %v71
    %v78 = vadd.f32 %v77, %v72
    %v79 = vadd.f32 %v78, %v73
    %v80 = vadd.f32 %v79, %v74
    %v81 = vadd.f32 %v80, %v75
    %vm82 = vcmask 564224
    %v83 = vsel %vm82, %v76, 0.0
    %v84 = vadd.f32 %v81, %v83
    %85 = vadd.xlane.f32.xlu0 %v84
    %v86 = vpop.xlane.xlu0 %85
    %v87 = vmul.f32 %v86, 0.0011947431
    %v88 = vsub.f32 %v70, %v87
    %v89 = vsub.f32 %v71, %v87
    %v90 = vsub.f32 %v72, %v87
    %v91 = vsub.f32 %v73, %v87
    %v92 = vsub.f32 %v74, %v87
    %v93 = vsub.f32 %v75, %v87
    %v94 = vsub.f32 %v76, %v87
    %v95 = vmul.f32 %v88, %v88
    %v96 = vmul.f32 %v89, %v89
    %v97 = vmul.f32 %v90, %v90
    %v98 = vmul.f32 %v91, %v91
    %v99 = vmul.f32 %v92, %v92
    %v100 = vmul.f32 %v93, %v93
    %v101 = vmul.f32 %v94, %v94
    %v102 = vadd.f32 %v95, %v96
    %v103 = vadd.f32 %v102, %v97
    %v104 = vadd.f32 %v103, %v98
    %v105 = vadd.f32 %v104, %v99
    %v106 = vadd.f32 %v105, %v100
    %v107 = vsel %vm82, %v101, 0.0
    %v108 = vadd.f32 %v106, %v107
    %109 = vadd.xlane.f32.xlu0 %v108
    %v110 = vpop.xlane.xlu0 %109
    %v111 = vmul.f32 %v110, 0.0011947431
    %v112 = vadd.f32 %v111, 1e-05
    %v113 = vrsqrt.pop %v112
    %v114 = vmul.f32 %v113, %v112
    %v115 = vmul.f32 %v114, %v113
    %v116 = vmul.f32 0.5, %v115
    %v117 = vsub.f32 1.5, %v116
    %v118 = vmul.f32 %v113, %v117
    %vm119 = vweird.f32 %v112
    %vm120 = vweird.f32 %v113
    %vm121 = vmor %vm119, %vm120
    %v122 = vsel %vm121, %v113, %v118
    %v123 = vpack.c.bf16 %v88, %v88
    %v124 = vpack.c.bf16 %v89, %v89
    %v125 = vpack.c.bf16 %v90, %v90
    %v126 = vpack.c.bf16 %v91, %v91
    %v127 = vpack.c.bf16 %v92, %v92
    %v128 = vpack.c.bf16 %v93, %v93
    %v129 = vpack.c.bf16 %v94, %v94
    %v130 = vld [vmem:[#allocation5] sm:$0xff]
    %v131 = vld [vmem:[#allocation5 + $0x8] sm:$0xff]
    %v132 = vld [vmem:[#allocation5 + $0x10] sm:$0xff]
    %v133 = vld [vmem:[#allocation5 + $0x18] sm:$0xff]
    %v134 = vld [vmem:[#allocation5 + $0x20] sm:$0xff]
    %v135 = vld [vmem:[#allocation5 + $0x28] sm:$0xff]
    %v136 = vld [vmem:[#allocation5 + $0x30] sm:$0xff]
    %v137 = vld [vmem:[#allocation5 + $0x38] sm:$0xff]
    %v138 = vld [vmem:[#allocation5 + $0x40] sm:$0xff]
    %v139 = vld [vmem:[#allocation5 + $0x48] sm:$0xff]
    %v140 = vld [vmem:[#allocation5 + $0x50] sm:$0xff]
    %v141 = vld [vmem:[#allocation5 + $0x58] sm:$0xff]
    %v142 = vld [vmem:[#allocation5 + $0x60] sm:$0xff]
    %v143 = vld [vmem:[#allocation5 + $0x68] sm:$0xff]
    %v144 = vld [vmem:[#allocation5 + $0x70] sm:$0xff]
    %v145 = vld [vmem:[#allocation5 + $0x78] sm:$0xff]
    %v146 = vld [vmem:[#allocation5 + $0x80] sm:$0xff]
    %v147 = vld [vmem:[#allocation5 + $0x88] sm:$0xff]
    %v148 = vld [vmem:[#allocation5 + $0x90] sm:$0xff]
    %v149 = vld [vmem:[#allocation5 + $0x98] sm:$0xff]
    %v150 = vld [vmem:[#allocation5 + $0xa0] sm:$0xff]
    %v151 = vld [vmem:[#allocation5 + $0xa8] sm:$0xff]
    %v152 = vld [vmem:[#allocation5 + $0xb0] sm:$0xff]
    %v153 = vld [vmem:[#allocation5 + $0xb8] sm:$0xff]
    %v154 = vld [vmem:[#allocation5 + $0xc0] sm:$0xff]
    %v155 = vld [vmem:[#allocation5 + $0xc8] sm:$0xff]
    %v156 = vld [vmem:[#allocation5 + $0xd0] sm:$0xff]
    %v157 = vld [vmem:[#allocation5 + $0xd8] sm:$0xff]
    %v158 = vld [vmem:[#allocation5 + $0xe0] sm:$0xff]
    %v159 = vld [vmem:[#allocation5 + $0xe8] sm:$0xff]
    %v160 = vld [vmem:[#allocation5 + $0xf0] sm:$0xff]
    %v161 = vld [vmem:[#allocation5 + $0xf8] sm:$0xff]
    %v162 = vld [vmem:[#allocation5 + $0x100] sm:$0xff]
    %v163 = vld [vmem:[#allocation5 + $0x108] sm:$0xff]
    %v164 = vld [vmem:[#allocation5 + $0x110] sm:$0xff]
    %v165 = vld [vmem:[#allocation5 + $0x118] sm:$0xff]
    %v166 = vld [vmem:[#allocation5 + $0x120] sm:$0xff]
    %v167 = vld [vmem:[#allocation5 + $0x128] sm:$0xff]
    %v168 = vld [vmem:[#allocation5 + $0x130] sm:$0xff]
    %v169 = vld [vmem:[#allocation5 + $0x138] sm:$0xff]
    %v170 = vld [vmem:[#allocation5 + $0x140] sm:$0xff]
    %v171 = vld [vmem:[#allocation5 + $0x148] sm:$0xff]
    %v172 = vld [vmem:[#allocation5 + $0x150] sm:$0xff]
    %v173 = vld [vmem:[#allocation5 + $0x158] sm:$0xff]
    %v174 = vld [vmem:[#allocation5 + $0x160] sm:$0xff]
    %v175 = vld [vmem:[#allocation5 + $0x168] sm:$0xff]
    %v176 = vld [vmem:[#allocation5 + $0x170] sm:$0xff]
    %v177 = vld [vmem:[#allocation5 + $0x178] sm:$0xff]
    %v178 = vld [vmem:[#allocation5 + $0x180] sm:$0xff]
    %v179 = vld [vmem:[#allocation5 + $0x188] sm:$0xff]
    %v180 = vld [vmem:[#allocation5 + $0x190] sm:$0xff]
    %v181 = vld [vmem:[#allocation5 + $0x198] sm:$0xff]
    %v182 = vld [vmem:[#allocation5 + $0x1a0] sm:$0xff]
    %v183 = vld [vmem:[#allocation5 + $0x1a8] sm:$0xff]
    %v184 = vld [vmem:[#allocation5 + $0x1b0] sm:$0xff]
    %v185 = vld [vmem:[#allocation5 + $0x1b8] sm:$0xff]
    %v186 = vld [vmem:[#allocation5 + $0x1c0] sm:$0xff]
    %v187 = vld [vmem:[#allocation5 + $0x1c8] sm:$0xff]
    %v188 = vld [vmem:[#allocation5 + $0x1d0] sm:$0xff]
    %v189 = vld [vmem:[#allocation5 + $0x1d8] sm:$0xff]
    %v190 = vld [vmem:[#allocation5 + $0x1e0] sm:$0xff]
    %v191 = vld [vmem:[#allocation5 + $0x1e8] sm:$0xff]
    %v192 = vld [vmem:[#allocation5 + $0x1f0] sm:$0xff]
    %v193 = vld [vmem:[#allocation5 + $0x1f8] sm:$0xff]
    %v194 = vld [vmem:[#allocation5 + $0x200] sm:$0xff]
    %v195 = vld [vmem:[#allocation5 + $0x208] sm:$0xff]
    %v196 = vld [vmem:[#allocation5 + $0x210] sm:$0xff]
    %v197 = vld [vmem:[#allocation5 + $0x218] sm:$0xff]
    %v198 = vld [vmem:[#allocation5 + $0x220] sm:$0xff]
    %v199 = vld [vmem:[#allocation5 + $0x228] sm:$0xff]
    %v200 = vld [vmem:[#allocation5 + $0x230] sm:$0xff]
    %v201 = vld [vmem:[#allocation5 + $0x238] sm:$0xff]
    %v202 = vld [vmem:[#allocation5 + $0x240] sm:$0xff]
    %v203 = vld [vmem:[#allocation5 + $0x248] sm:$0xff]
    %v204 = vld [vmem:[#allocation5 + $0x250] sm:$0xff]
    %v205 = vld [vmem:[#allocation5 + $0x258] sm:$0xff]
    %v206 = vld [vmem:[#allocation5 + $0x260] sm:$0xff]
    %v207 = vld [vmem:[#allocation5 + $0x268] sm:$0xff]
    %v208 = vld [vmem:[#allocation5 + $0x270] sm:$0xff]
    %v209 = vld [vmem:[#allocation5 + $0x278] sm:$0xff]
    %v210 = vld [vmem:[#allocation5 + $0x280] sm:$0xff]
    %v211 = vld [vmem:[#allocation5 + $0x288] sm:$0xff]
    %v212 = vld [vmem:[#allocation5 + $0x290] sm:$0xff]
    %v213 = vld [vmem:[#allocation5 + $0x298] sm:$0xff]
    %v214 = vld [vmem:[#allocation5 + $0x2a0] sm:$0xff]
    %v215 = vld [vmem:[#allocation5 + $0x2a8] sm:$0xff]
    %v216 = vld [vmem:[#allocation5 + $0x2b0] sm:$0xff]
    %v217 = vld [vmem:[#allocation5 + $0x2b8] sm:$0xff]
    %v218 = vld [vmem:[#allocation5 + $0x2c0] sm:$0xff]
    %v219 = vld [vmem:[#allocation5 + $0x2c8] sm:$0xff]
    %v220 = vld [vmem:[#allocation5 + $0x2d0] sm:$0xff]
    %v221 = vld [vmem:[#allocation5 + $0x2d8] sm:$0xff]
    %v222 = vld [vmem:[#allocation5 + $0x2e0] sm:$0xff]
    %v223 = vld [vmem:[#allocation5 + $0x2e8] sm:$0xff]
    %v224 = vld [vmem:[#allocation5 + $0x2f0] sm:$0xff]
    %v225 = vld [vmem:[#allocation5 + $0x2f8] sm:$0xff]
    %v226 = vld [vmem:[#allocation5 + $0x300] sm:$0xff]
    %v227 = vld [vmem:[#allocation5 + $0x308] sm:$0xff]
    %v228 = vld [vmem:[#allocation5 + $0x310] sm:$0xff]
    %v229 = vld [vmem:[#allocation5 + $0x318] sm:$0xff]
    %v230 = vld [vmem:[#allocation5 + $0x320] sm:$0xff]
    %v231 = vld [vmem:[#allocation5 + $0x328] sm:$0xff]
    %v232 = vld [vmem:[#allocation5 + $0x330] sm:$0xff]
    %v233 = vld [vmem:[#allocation5 + $0x338] sm:$0xff]
    %v234 = vld [vmem:[#allocation5 + $0x340] sm:$0x77]
    %v340 = vunpack.c.l.b16 %v130
    %v341 = vunpack.c.h.b16 %v130
    %v342 = vunpack.c.l.b16 %v131
    %v343 = vunpack.c.h.b16 %v131
    %v344 = vunpack.c.l.b16 %v132
    %v345 = vunpack.c.h.b16 %v132
    %v346 = vunpack.c.l.b16 %v133
    %v347 = vunpack.c.h.b16 %v133
    %v348 = vunpack.c.l.b16 %v134
    %v349 = vunpack.c.h.b16 %v134
    %v350 = vunpack.c.l.b16 %v135
    %v351 = vunpack.c.h.b16 %v135
    %v352 = vunpack.c.l.b16 %v136
    %v353 = vunpack.c.h.b16 %v136
    %v354 = vunpack.c.l.b16 %v137
    %v355 = vunpack.c.h.b16 %v137
    %v356 = vunpack.c.l.b16 %v138
    %v357 = vunpack.c.h.b16 %v138
    %v358 = vunpack.c.l.b16 %v139
    %v359 = vunpack.c.h.b16 %v139
    %v360 = vunpack.c.l.b16 %v140
    %v361 = vunpack.c.h.b16 %v140
    %v362 = vunpack.c.l.b16 %v141
    %v363 = vunpack.c.h.b16 %v141
    %v364 = vunpack.c.l.b16 %v142
    %v365 = vunpack.c.h.b16 %v142
    %v366 = vunpack.c.l.b16 %v143
    %v367 = vunpack.c.h.b16 %v143
    %v368 = vunpack.c.l.b16 %v144
    %v369 = vunpack.c.h.b16 %v144
    %v370 = vunpack.c.l.b16 %v145
    %v371 = vunpack.c.h.b16 %v145
    %v372 = vunpack.c.l.b16 %v146
    %v373 = vunpack.c.h.b16 %v146
    %v374 = vunpack.c.l.b16 %v147
    %v375 = vunpack.c.h.b16 %v147
    %v376 = vunpack.c.l.b16 %v148
    %v377 = vunpack.c.h.b16 %v148
    %v378 = vunpack.c.l.b16 %v149
    %v379 = vunpack.c.h.b16 %v149
    %v380 = vunpack.c.l.b16 %v150
    %v381 = vunpack.c.h.b16 %v150
    %v382 = vunpack.c.l.b16 %v151
    %v383 = vunpack.c.h.b16 %v151
    %v384 = vunpack.c.l.b16 %v152
    %v385 = vunpack.c.h.b16 %v152
    %v386 = vunpack.c.l.b16 %v153
    %v387 = vunpack.c.h.b16 %v153
    %v388 = vunpack.c.l.b16 %v154
    %v389 = vunpack.c.h.b16 %v154
    %v390 = vunpack.c.l.b16 %v155
    %v391 = vunpack.c.h.b16 %v155
    %v392 = vunpack.c.l.b16 %v156
    %v393 = vunpack.c.h.b16 %v156
    %v394 = vunpack.c.l.b16 %v157
    %v395 = vunpack.c.h.b16 %v157
    %v396 = vunpack.c.l.b16 %v158
    %v397 = vunpack.c.h.b16 %v158
    %v398 = vunpack.c.l.b16 %v159
    %v399 = vunpack.c.h.b16 %v159
    %v400 = vunpack.c.l.b16 %v160
    %v401 = vunpack.c.h.b16 %v160
    %v402 = vunpack.c.l.b16 %v161
    %v403 = vunpack.c.h.b16 %v161
    %v404 = vunpack.c.l.b16 %v162
    %v405 = vunpack.c.h.b16 %v162
    %v406 = vunpack.c.l.b16 %v163
    %v407 = vunpack.c.h.b16 %v163
    %v408 = vunpack.c.l.b16 %v164
    %v409 = vunpack.c.h.b16 %v164
    %v410 = vunpack.c.l.b16 %v165
    %v411 = vunpack.c.h.b16 %v165
    %v412 = vunpack.c.l.b16 %v166
    %v413 = vunpack.c.h.b16 %v166
    %v414 = vunpack.c.l.b16 %v167
    %v415 = vunpack.c.h.b16 %v167
    %v416 = vunpack.c.l.b16 %v168
    %v417 = vunpack.c.h.b16 %v168
    %v418 = vunpack.c.l.b16 %v169
    %v419 = vunpack.c.h.b16 %v169
    %v420 = vunpack.c.l.b16 %v170
    %v421 = vunpack.c.h.b16 %v170
    %v422 = vunpack.c.l.b16 %v171
    %v423 = vunpack.c.h.b16 %v171
    %v424 = vunpack.c.l.b16 %v172
    %v425 = vunpack.c.h.b16 %v172
    %v426 = vunpack.c.l.b16 %v173
    %v427 = vunpack.c.h.b16 %v173
    %v428 = vunpack.c.l.b16 %v174
    %v429 = vunpack.c.h.b16 %v174
    %v430 = vunpack.c.l.b16 %v175
    %v431 = vunpack.c.h.b16 %v175
    %v432 = vunpack.c.l.b16 %v176
    %v433 = vunpack.c.h.b16 %v176
    %v434 = vunpack.c.l.b16 %v177
    %v435 = vunpack.c.h.b16 %v177
    %v436 = vunpack.c.l.b16 %v178
    %v437 = vunpack.c.h.b16 %v178
    %v438 = vunpack.c.l.b16 %v179
    %v439 = vunpack.c.h.b16 %v179
    %v440 = vunpack.c.l.b16 %v180
    %v441 = vunpack.c.h.b16 %v180
    %v442 = vunpack.c.l.b16 %v181
    %v443 = vunpack.c.h.b16 %v181
    %v444 = vunpack.c.l.b16 %v182
    %v445 = vunpack.c.h.b16 %v182
    %v446 = vunpack.c.l.b16 %v183
    %v447 = vunpack.c.h.b16 %v183
    %v448 = vunpack.c.l.b16 %v184
    %v449 = vunpack.c.h.b16 %v184
    %v450 = vunpack.c.l.b16 %v185
    %v451 = vunpack.c.h.b16 %v185
    %v452 = vunpack.c.l.b16 %v186
    %v453 = vunpack.c.h.b16 %v186
    %v454 = vunpack.c.l.b16 %v187
    %v455 = vunpack.c.h.b16 %v187
    %v456 = vunpack.c.l.b16 %v188
    %v457 = vunpack.c.h.b16 %v188
    %v458 = vunpack.c.l.b16 %v189
    %v459 = vunpack.c.h.b16 %v189
    %v460 = vunpack.c.l.b16 %v190
    %v461 = vunpack.c.h.b16 %v190
    %v462 = vunpack.c.l.b16 %v191
    %v463 = vunpack.c.h.b16 %v191
    %v464 = vunpack.c.l.b16 %v192
    %v465 = vunpack.c.h.b16 %v192
    %v466 = vunpack.c.l.b16 %v193
    %v467 = vunpack.c.h.b16 %v193
    %v468 = vunpack.c.l.b16 %v194
    %v469 = vunpack.c.h.b16 %v194
    %v470 = vunpack.c.l.b16 %v195
    %v471 = vunpack.c.h.b16 %v195
    %v472 = vunpack.c.l.b16 %v196
    %v473 = vunpack.c.h.b16 %v196
    %v474 = vunpack.c.l.b16 %v197
    %v475 = vunpack.c.h.b16 %v197
    %v476 = vunpack.c.l.b16 %v198
    %v477 = vunpack.c.h.b16 %v198
    %v478 = vunpack.c.l.b16 %v199
    %v479 = vunpack.c.h.b16 %v199
    %v480 = vunpack.c.l.b16 %v200
    %v481 = vunpack.c.h.b16 %v200
    %v482 = vunpack.c.l.b16 %v201
    %v483 = vunpack.c.h.b16 %v201
    %v484 = vunpack.c.l.b16 %v202
    %v485 = vunpack.c.h.b16 %v202
    %v486 = vunpack.c.l.b16 %v203
    %v487 = vunpack.c.h.b16 %v203
    %v488 = vunpack.c.l.b16 %v204
    %v489 = vunpack.c.h.b16 %v204
    %v490 = vunpack.c.l.b16 %v205
    %v491 = vunpack.c.h.b16 %v205
    %v492 = vunpack.c.l.b16 %v206
    %v493 = vunpack.c.h.b16 %v206
    %v494 = vunpack.c.l.b16 %v207
    %v495 = vunpack.c.h.b16 %v207
    %v496 = vunpack.c.l.b16 %v208
    %v497 = vunpack.c.h.b16 %v208
    %v498 = vunpack.c.l.b16 %v209
    %v499 = vunpack.c.h.b16 %v209
    %v500 = vunpack.c.l.b16 %v210
    %v501 = vunpack.c.h.b16 %v210
    %v502 = vunpack.c.l.b16 %v211
    %v503 = vunpack.c.h.b16 %v211
    %v504 = vunpack.c.l.b16 %v212
    %v505 = vunpack.c.h.b16 %v212
    %v506 = vunpack.c.l.b16 %v213
    %v507 = vunpack.c.h.b16 %v213
    %v508 = vunpack.c.l.b16 %v214
    %v509 = vunpack.c.h.b16 %v214
    %v510 = vunpack.c.l.b16 %v215
    %v511 = vunpack.c.h.b16 %v215
    %v512 = vunpack.c.l.b16 %v216
    %v513 = vunpack.c.h.b16 %v216
    %v514 = vunpack.c.l.b16 %v217
    %v515 = vunpack.c.h.b16 %v217
    %v516 = vunpack.c.l.b16 %v218
    %v517 = vunpack.c.h.b16 %v218
    %v518 = vunpack.c.l.b16 %v219
    %v519 = vunpack.c.h.b16 %v219
    %v520 = vunpack.c.l.b16 %v220
    %v521 = vunpack.c.h.b16 %v220
    %v522 = vunpack.c.l.b16 %v221
    %v523 = vunpack.c.h.b16 %v221
    %v524 = vunpack.c.l.b16 %v222
    %v525 = vunpack.c.h.b16 %v222
    %v526 = vunpack.c.l.b16 %v223
    %v527 = vunpack.c.h.b16 %v223
    %v528 = vunpack.c.l.b16 %v224
    %v529 = vunpack.c.h.b16 %v224
    %v530 = vunpack.c.l.b16 %v225
    %v531 = vunpack.c.h.b16 %v225
    %v532 = vunpack.c.l.b16 %v226
    %v533 = vunpack.c.h.b16 %v226
    %v534 = vunpack.c.l.b16 %v227
    %v535 = vunpack.c.h.b16 %v227
    %v536 = vunpack.c.l.b16 %v228
    %v537 = vunpack.c.h.b16 %v228
    %v538 = vunpack.c.l.b16 %v229
    %v539 = vunpack.c.h.b16 %v229
    %v540 = vunpack.c.l.b16 %v230
    %v541 = vunpack.c.h.b16 %v230
    %v542 = vunpack.c.l.b16 %v231
    %v543 = vunpack.c.h.b16 %v231
    %v544 = vunpack.c.l.b16 %v232
    %v545 = vunpack.c.h.b16 %v232
    %v546 = vunpack.c.l.b16 %v233
    %v547 = vunpack.c.h.b16 %v233
    %v548 = vunpack.c.l.b16 %v234
    %v549 = vunpack.c.h.b16 %v234
    %v550 = vpack.c.b16 %v342, %v340
    %v551 = vpack.c.b16 %v343, %v341
    %v552 = vpack.c.b16 %v346, %v344
    %v553 = vpack.c.b16 %v347, %v345
    %v554 = vpack.c.b16 %v350, %v348
    %v555 = vpack.c.b16 %v351, %v349
    %v556 = vpack.c.b16 %v354, %v352
    %v557 = vpack.c.b16 %v355, %v353
    %v558 = vpack.c.b16 %v358, %v356
    %v559 = vpack.c.b16 %v359, %v357
    %v560 = vpack.c.b16 %v362, %v360
    %v561 = vpack.c.b16 %v363, %v361
    %v562 = vpack.c.b16 %v366, %v364
    %v563 = vpack.c.b16 %v367, %v365
    %v564 = vpack.c.b16 %v370, %v368
    %v565 = vpack.c.b16 %v371, %v369
    %v566 = vpack.c.b16 %v374, %v372
    %v567 = vpack.c.b16 %v375, %v373
    %v568 = vpack.c.b16 %v378, %v376
    %v569 = vpack.c.b16 %v379, %v377
    %v570 = vpack.c.b16 %v382, %v380
    %v571 = vpack.c.b16 %v383, %v381
    %v572 = vpack.c.b16 %v386, %v384
    %v573 = vpack.c.b16 %v387, %v385
    %v574 = vpack.c.b16 %v390, %v388
    %v575 = vpack.c.b16 %v391, %v389
    %v576 = vpack.c.b16 %v394, %v392
    %v577 = vpack.c.b16 %v395, %v393
    %v578 = vpack.c.b16 %v398, %v396
    %v579 = vpack.c.b16 %v399, %v397
    %v580 = vpack.c.b16 %v402, %v400
    %v581 = vpack.c.b16 %v403, %v401
    %v582 = vpack.c.b16 %v406, %v404
    %v583 = vpack.c.b16 %v407, %v405
    %v584 = vpack.c.b16 %v410, %v408
    %v585 = vpack.c.b16 %v411, %v409
    %v586 = vpack.c.b16 %v414, %v412
    %v587 = vpack.c.b16 %v415, %v413
    %v588 = vpack.c.b16 %v418, %v416
    %v589 = vpack.c.b16 %v419, %v417
    %v590 = vpack.c.b16 %v422, %v420
    %v591 = vpack.c.b16 %v423, %v421
    %v592 = vpack.c.b16 %v426, %v424
    %v593 = vpack.c.b16 %v427, %v425
    %v594 = vpack.c.b16 %v430, %v428
    %v595 = vpack.c.b16 %v431, %v429
    %v596 = vpack.c.b16 %v434, %v432
    %v597 = vpack.c.b16 %v435, %v433
    %v598 = vpack.c.b16 %v438, %v436
    %v599 = vpack.c.b16 %v439, %v437
    %v600 = vpack.c.b16 %v442, %v440
    %v601 = vpack.c.b16 %v443, %v441
    %v602 = vpack.c.b16 %v446, %v444
    %v603 = vpack.c.b16 %v447, %v445
    %v604 = vpack.c.b16 %v450, %v448
    %v605 = vpack.c.b16 %v451, %v449
    %v606 = vpack.c.b16 %v454, %v452
    %v607 = vpack.c.b16 %v455, %v453
    %v608 = vpack.c.b16 %v458, %v456
    %v609 = vpack.c.b16 %v459, %v457
    %v610 = vpack.c.b16 %v462, %v460
    %v611 = vpack.c.b16 %v463, %v461
    %v612 = vpack.c.b16 %v466, %v464
    %v613 = vpack.c.b16 %v467, %v465
    %v614 = vpack.c.b16 %v470, %v468
    %v615 = vpack.c.b16 %v471, %v469
    %v616 = vpack.c.b16 %v474, %v472
    %v617 = vpack.c.b16 %v475, %v473
    %v618 = vpack.c.b16 %v478, %v476
    %v619 = vpack.c.b16 %v479, %v477
    %v620 = vpack.c.b16 %v482, %v480
    %v621 = vpack.c.b16 %v483, %v481
    %v622 = vpack.c.b16 %v486, %v484
    %v623 = vpack.c.b16 %v487, %v485
    %v624 = vpack.c.b16 %v490, %v488
    %v625 = vpack.c.b16 %v491, %v489
    %v626 = vpack.c.b16 %v494, %v492
    %v627 = vpack.c.b16 %v495, %v493
    %v628 = vpack.c.b16 %v498, %v496
    %v629 = vpack.c.b16 %v499, %v497
    %v630 = vpack.c.b16 %v502, %v500
    %v631 = vpack.c.b16 %v503, %v501
    %v632 = vpack.c.b16 %v506, %v504
    %v633 = vpack.c.b16 %v507, %v505
    %v634 = vpack.c.b16 %v510, %v508
    %v635 = vpack.c.b16 %v511, %v509
    %v636 = vpack.c.b16 %v514, %v512
    %v637 = vpack.c.b16 %v515, %v513
    %v638 = vpack.c.b16 %v518, %v516
    %v639 = vpack.c.b16 %v519, %v517
    %v640 = vpack.c.b16 %v522, %v520
    %v641 = vpack.c.b16 %v523, %v521
    %v642 = vpack.c.b16 %v526, %v524
    %v643 = vpack.c.b16 %v527, %v525
    %v644 = vpack.c.b16 %v530, %v528
    %v645 = vpack.c.b16 %v531, %v529
    %v646 = vpack.c.b16 %v534, %v532
    %v647 = vpack.c.b16 %v535, %v533
    %v648 = vpack.c.b16 %v538, %v536
    %v649 = vpack.c.b16 %v539, %v537
    %v650 = vpack.c.b16 %v542, %v540
    %v651 = vpack.c.b16 %v543, %v541
    %v652 = vpack.c.b16 %v546, %v544
    %v653 = vpack.c.b16 %v547, %v545
    %v654 = vpack.c.b16 %v548, %v548
    %v655 = vpack.c.b16 %v549, %v549
    %v761 = vsel %vm82, %v129, 0
    %vm763 = vcmask 1041408
    %vm764 = vcmask 1042432
    %v765 = vsel %vm763, 4294967295, 65535
    %v766 = vsel %vm764, %v765, 0
    %v768 = vand.u32 %v654, %v766
    %v771 = vand.u32 %v655, %v766
    %773 = vmatpush.bf16.msra.mxu0 %v564
    %774 = vmatpush.bf16.msra.mxu0 %v562
    %775 = vmatpush.bf16.msra.mxu0 %v560
    %776 = vmatpush.bf16.msra.mxu0 %v558
    %777 = vmatpush.bf16.msra.mxu0 %v556
    %778 = vmatpush.bf16.msra.mxu0 %v554
    %779 = vmatpush.bf16.msra.mxu0 %v552
    %780 = vmatpush.bf16.msra.mxu0 %v550
    %781 = vmatmul.bf16.gmra.mxu0 %v123
    %v782 = vpop.f32.mrf.mxu0
    %v783 = vadd.f32 0.0, %v782
    %v784 = vpop.f32.mrf.mxu0
    %785 = vdwg.mxu0
    %786 = vmatpush.bf16.msra.mxu0 %v580
    %787 = vmatpush.bf16.msra.mxu0 %v578
    %788 = vmatpush.bf16.msra.mxu0 %v576
    %789 = vmatpush.bf16.msra.mxu0 %v574
    %790 = vmatpush.bf16.msra.mxu0 %v572
    %791 = vmatpush.bf16.msra.mxu0 %v570
    %792 = vmatpush.bf16.msra.mxu0 %v568
    %793 = vmatpush.bf16.msra.mxu0 %v566
    %794 = vmatmul.bf16.gmra.mxu0 %v124
    %v795 = vpop.f32.mrf.mxu0
    %v796 = vadd.f32 %v783, %v795
    %v797 = vpop.f32.mrf.mxu0
    %798 = vdwg.mxu0
    %799 = vmatpush.bf16.msra.mxu0 %v596
    %800 = vmatpush.bf16.msra.mxu0 %v594
    %801 = vmatpush.bf16.msra.mxu0 %v592
    %802 = vmatpush.bf16.msra.mxu0 %v590
    %803 = vmatpush.bf16.msra.mxu0 %v588
    %804 = vmatpush.bf16.msra.mxu0 %v586
    %805 = vmatpush.bf16.msra.mxu0 %v584
    %806 = vmatpush.bf16.msra.mxu0 %v582
    %807 = vmatmul.bf16.gmra.mxu0 %v125
    %v808 = vpop.f32.mrf.mxu0
    %v809 = vadd.f32 %v796, %v808
    %v810 = vpop.f32.mrf.mxu0
    %811 = vdwg.mxu0
    %812 = vmatpush.bf16.msra.mxu0 %v612
    %813 = vmatpush.bf16.msra.mxu0 %v610
    %814 = vmatpush.bf16.msra.mxu0 %v608
    %815 = vmatpush.bf16.msra.mxu0 %v606
    %816 = vmatpush.bf16.msra.mxu0 %v604
    %817 = vmatpush.bf16.msra.mxu0 %v602
    %818 = vmatpush.bf16.msra.mxu0 %v600
    %819 = vmatpush.bf16.msra.mxu0 %v598
    %820 = vmatmul.bf16.gmra.mxu0 %v126
    %v821 = vpop.f32.mrf.mxu0
    %v822 = vadd.f32 %v809, %v821
    %v823 = vpop.f32.mrf.mxu0
    %824 = vdwg.mxu0
    %825 = vmatpush.bf16.msra.mxu0 %v628
    %826 = vmatpush.bf16.msra.mxu0 %v626
    %827 = vmatpush.bf16.msra.mxu0 %v624
    %828 = vmatpush.bf16.msra.mxu0 %v622
    %829 = vmatpush.bf16.msra.mxu0 %v620
    %830 = vmatpush.bf16.msra.mxu0 %v618
    %831 = vmatpush.bf16.msra.mxu0 %v616
    %832 = vmatpush.bf16.msra.mxu0 %v614
    %833 = vmatmul.bf16.gmra.mxu0 %v127
    %v834 = vpop.f32.mrf.mxu0
    %v835 = vadd.f32 %v822, %v834
    %v836 = vpop.f32.mrf.mxu0
    %837 = vdwg.mxu0
    %838 = vmatpush.bf16.msra.mxu0 %v644
    %839 = vmatpush.bf16.msra.mxu0 %v642
    %840 = vmatpush.bf16.msra.mxu0 %v640
    %841 = vmatpush.bf16.msra.mxu0 %v638
    %842 = vmatpush.bf16.msra.mxu0 %v636
    %843 = vmatpush.bf16.msra.mxu0 %v634
    %844 = vmatpush.bf16.msra.mxu0 %v632
    %845 = vmatpush.bf16.msra.mxu0 %v630
    %846 = vmatmul.bf16.gmra.mxu0 %v128
    %v847 = vpop.f32.mrf.mxu0
    %v848 = vadd.f32 %v835, %v847
    %v849 = vpop.f32.mrf.mxu0
    %850 = vdwg.mxu0
    %851 = vmatpush.bf16.msra.mxu0 0
    %852 = vmatpush.bf16.msra.mxu0 0
    %853 = vmatpush.bf16.msra.mxu0 0
    %854 = vmatpush.bf16.msra.mxu0 %v768
    %855 = vmatpush.bf16.msra.mxu0 %v652
    %856 = vmatpush.bf16.msra.mxu0 %v650
    %857 = vmatpush.bf16.msra.mxu0 %v648
    %858 = vmatpush.bf16.msra.mxu0 %v646
    %859 = vmatmul.bf16.gmra.mxu0 %v761
    %v860 = vpop.f32.mrf.mxu0
    %v861 = vadd.f32 %v848, %v860
    %v862 = vpop.f32.mrf.mxu0
    %863 = vdwg.mxu0
    %864 = vmatpush.bf16.msra.mxu0 %v565
    %865 = vmatpush.bf16.msra.mxu0 %v563
    %866 = vmatpush.bf16.msra.mxu0 %v561
    %867 = vmatpush.bf16.msra.mxu0 %v559
    %868 = vmatpush.bf16.msra.mxu0 %v557
    %869 = vmatpush.bf16.msra.mxu0 %v555
    %870 = vmatpush.bf16.msra.mxu0 %v553
    %871 = vmatpush.bf16.msra.mxu0 %v551
    %872 = vmatmul.bf16.gmra.mxu0 %v123
    %v873 = vpop.f32.mrf.mxu0
    %v874 = vadd.f32 0.0, %v873
    %v875 = vpop.f32.mrf.mxu0
    %876 = vdwg.mxu0
    %877 = vmatpush.bf16.msra.mxu0 %v581
    %878 = vmatpush.bf16.msra.mxu0 %v579
    %879 = vmatpush.bf16.msra.mxu0 %v577
    %880 = vmatpush.bf16.msra.mxu0 %v575
    %881 = vmatpush.bf16.msra.mxu0 %v573
    %882 = vmatpush.bf16.msra.mxu0 %v571
    %883 = vmatpush.bf16.msra.mxu0 %v569
    %884 = vmatpush.bf16.msra.mxu0 %v567
    %885 = vmatmul.bf16.gmra.mxu0 %v124
    %v886 = vpop.f32.mrf.mxu0
    %v887 = vadd.f32 %v874, %v886
    %v888 = vpop.f32.mrf.mxu0
    %889 = vdwg.mxu0
    %890 = vmatpush.bf16.msra.mxu0 %v597
    %891 = vmatpush.bf16.msra.mxu0 %v595
    %892 = vmatpush.bf16.msra.mxu0 %v593
    %893 = vmatpush.bf16.msra.mxu0 %v591
    %894 = vmatpush.bf16.msra.mxu0 %v589
    %895 = vmatpush.bf16.msra.mxu0 %v587
    %896 = vmatpush.bf16.msra.mxu0 %v585
    %897 = vmatpush.bf16.msra.mxu0 %v583
    %898 = vmatmul.bf16.gmra.mxu0 %v125
    %v899 = vpop.f32.mrf.mxu0
    %v900 = vadd.f32 %v887, %v899
    %v901 = vpop.f32.mrf.mxu0
    %902 = vdwg.mxu0
    %903 = vmatpush.bf16.msra.mxu0 %v613
    %904 = vmatpush.bf16.msra.mxu0 %v611
    %905 = vmatpush.bf16.msra.mxu0 %v609
    %906 = vmatpush.bf16.msra.mxu0 %v607
    %907 = vmatpush.bf16.msra.mxu0 %v605
    %908 = vmatpush.bf16.msra.mxu0 %v603
    %909 = vmatpush.bf16.msra.mxu0 %v601
    %910 = vmatpush.bf16.msra.mxu0 %v599
    %911 = vmatmul.bf16.gmra.mxu0 %v126
    %v912 = vpop.f32.mrf.mxu0
    %v913 = vadd.f32 %v900, %v912
    %v914 = vpop.f32.mrf.mxu0
    %915 = vdwg.mxu0
    %916 = vmatpush.bf16.msra.mxu0 %v629
    %917 = vmatpush.bf16.msra.mxu0 %v627
    %918 = vmatpush.bf16.msra.mxu0 %v625
    %919 = vmatpush.bf16.msra.mxu0 %v623
    %920 = vmatpush.bf16.msra.mxu0 %v621
    %921 = vmatpush.bf16.msra.mxu0 %v619
    %922 = vmatpush.bf16.msra.mxu0 %v617
    %923 = vmatpush.bf16.msra.mxu0 %v615
    %924 = vmatmul.bf16.gmra.mxu0 %v127
    %v925 = vpop.f32.mrf.mxu0
    %v926 = vadd.f32 %v913, %v925
    %v927 = vpop.f32.mrf.mxu0
    %928 = vdwg.mxu0
    %929 = vmatpush.bf16.msra.mxu0 %v645
    %930 = vmatpush.bf16.msra.mxu0 %v643
    %931 = vmatpush.bf16.msra.mxu0 %v641
    %932 = vmatpush.bf16.msra.mxu0 %v639
    %933 = vmatpush.bf16.msra.mxu0 %v637
    %934 = vmatpush.bf16.msra.mxu0 %v635
    %935 = vmatpush.bf16.msra.mxu0 %v633
    %936 = vmatpush.bf16.msra.mxu0 %v631
    %937 = vmatmul.bf16.gmra.mxu0 %v128
    %v938 = vpop.f32.mrf.mxu0
    %v939 = vadd.f32 %v926, %v938
    %v940 = vpop.f32.mrf.mxu0
    %941 = vdwg.mxu0
    %942 = vmatpush.bf16.msra.mxu0 0
    %943 = vmatpush.bf16.msra.mxu0 0
    %944 = vmatpush.bf16.msra.mxu0 0
    %945 = vmatpush.bf16.msra.mxu0 %v771
    %946 = vmatpush.bf16.msra.mxu0 %v653
    %947 = vmatpush.bf16.msra.mxu0 %v651
    %948 = vmatpush.bf16.msra.mxu0 %v649
    %949 = vmatpush.bf16.msra.mxu0 %v647
    %950 = vmatmul.bf16.gmra.mxu0 %v761
    %v951 = vpop.f32.mrf.mxu0
    %v952 = vadd.f32 %v939, %v951
    %v953 = vpop.f32.mrf.mxu0
    %954 = vdwg.mxu0
    %v955 = vmul.f32 %v122, %v861
    %v956 = vld [vmem:[%s3] sm:$0x1]
    %v958 = vperm.slane %v956, 0
    %v960 = vadd.f32 %v955, %v958
    %v961 = vmul.f32 %v960, 0.5
    %v962 = vmul.f32 %v960, 0.044715
    %v963 = vmul.f32 %v962, %v960
    %v964 = vmul.f32 %v963, %v960
    %v965 = vadd.f32 %v960, %v964
    %v966 = vmul.f32 %v965, 0.7978846
    %v967 = vtanh.pop %v966
    %v968 = vadd.f32 %v967, 1.0
    %v969 = vmul.f32 %v961, %v968
    %v970 = vpack.c.bf16 %v969, %v969
    %v971 = vld [vmem:[#allocation7] sm:$0xf]
    %v972 = vld [vmem:[#allocation7 + $0x4] sm:$0xf]
    %v973 = vld [vmem:[#allocation7 + $0x8] sm:$0xf]
    %v974 = vld [vmem:[#allocation7 + $0xc] sm:$0xf]
    %v975 = vld [vmem:[#allocation7 + $0x10] sm:$0xf]
    %v976 = vld [vmem:[#allocation7 + $0x14] sm:$0xf]
    %v977 = vld [vmem:[#allocation7 + $0x18] sm:$0xf]
    %v978 = vld [vmem:[#allocation7 + $0x1c] sm:$0xf]
    %v979 = vld [vmem:[#allocation7 + $0x20] sm:$0xf]
    %v980 = vld [vmem:[#allocation7 + $0x24] sm:$0xf]
    %v981 = vld [vmem:[#allocation7 + $0x28] sm:$0xf]
    %v982 = vld [vmem:[#allocation7 + $0x2c] sm:$0xf]
    %v983 = vld [vmem:[#allocation7 + $0x30] sm:$0xf]
    %v984 = vld [vmem:[#allocation7 + $0x34] sm:$0xf]
    %v985 = vld [vmem:[#allocation7 + $0x38] sm:$0xf]
    %v986 = vld [vmem:[#allocation7 + $0x3c] sm:$0xf]
    %v1003 = vunpack.c.l.b16 %v971
    %v1004 = vunpack.c.l.b16 %v972
    %v1005 = vunpack.c.l.b16 %v973
    %v1006 = vunpack.c.l.b16 %v974
    %v1007 = vunpack.c.l.b16 %v975
    %v1008 = vunpack.c.l.b16 %v976
    %v1009 = vunpack.c.l.b16 %v977
    %v1010 = vunpack.c.l.b16 %v978
    %v1011 = vunpack.c.l.b16 %v979
    %v1012 = vunpack.c.l.b16 %v980
    %v1013 = vunpack.c.l.b16 %v981
    %v1014 = vunpack.c.l.b16 %v982
    %v1015 = vunpack.c.l.b16 %v983
    %v1016 = vunpack.c.l.b16 %v984
    %v1017 = vunpack.c.l.b16 %v985
    %v1018 = vunpack.c.l.b16 %v986
    %v1019 = vpack.c.b16 %v1004, %v1003
    %v1020 = vpack.c.b16 %v1006, %v1005
    %v1021 = vpack.c.b16 %v1008, %v1007
    %v1022 = vpack.c.b16 %v1010, %v1009
    %v1023 = vpack.c.b16 %v1012, %v1011
    %v1024 = vpack.c.b16 %v1014, %v1013
    %v1025 = vpack.c.b16 %v1016, %v1015
    %v1026 = vpack.c.b16 %v1018, %v1017
    %1035 = vmatpush.bf16.msra.mxu0 %v1026
    %1036 = vmatpush.bf16.msra.mxu0 %v1025
    %1037 = vmatpush.bf16.msra.mxu0 %v1024
    %1038 = vmatpush.bf16.msra.mxu0 %v1023
    %1039 = vmatpush.bf16.msra.mxu0 %v1022
    %1040 = vmatpush.bf16.msra.mxu0 %v1021
    %1041 = vmatpush.bf16.msra.mxu0 %v1020
    %1042 = vmatpush.bf16.msra.mxu0 %v1019
    %1043 = vmatmul.bf16.gmra.mxu0 %v970
    %v1044 = vpop.f32.mrf.mxu0
    %v1045 = vadd.f32 0.0, %v1044
    %v1046 = vpop.f32.mrf.mxu0
    %1047 = vdwg.mxu0
    %v1048 = vld [vmem:[%s4] sm:$0x1]
    %v1050 = vperm.slane %v1048, 0
    %v1052 = vmul.f32 %v87, %v1050
    %v1053 = vadd.f32 %v952, %v1052
    %v1054 = vadd.f32 %v1053, %v1045
    %v1055 = vld [vmem:[%s5] sm:$0x1]
    %v1057 = vperm.slane %v1055, 0
    %v1059 = vadd.f32 %v1054, %v1057
    %vm1060 = vcmask 261120
    %1061 = vst.msk [vmem:[#allocation8] sm:$0xff] %vm1060, %v1059
    // Predicated region
    $region38: #{tpu_custom_call.1} parent=1 // pred_check
      _
    $region39: #{tpu_custom_call.1} parent=1 // pred_check_branch
      %1063 = sbr.rel (0) target = $region41
    $region40: #{tpu_custom_call.1} parent=1 // pred_region
      %1065 = vsyncadd [#allocation4], 0
      %s1067 = sshll.u32 [#allocation8], 4
      %s1068 = int_to_ptr.vmem [resolvable:$true] %s1067
      %s1069 = sshll.u32 %s6, 4
      %s1070 = int_to_ptr.hbm [resolvable:$true] %s1069
      %1072 = dma.vmem_to_hbm [thread:$0]  %s1068, 128, %s1070, [#allocation4]
    $region41: #{tpu_custom_call.1} parent=1 // pred_fallthru
      _
    // Predicated region
    $region42: #{tpu_custom_call.1} parent=1 // pred_check
      _
    $region43: #{tpu_custom_call.1} parent=1 // pred_check_branch
      %1074 = sbr.rel (0) target = $region45
    $region44: #{tpu_custom_call.1} parent=1 // pred_region
      %1076 = dma.done [#allocation4], 128
    $region45: #{tpu_custom_call.1} parent=1 // pred_fallthru
      _
    %1077 = vsyncpa [#allocation3], 1
    %1078 = vsyncpa [#allocation6], 1
    %1079 = vsyncpa [#allocation4], 1

</llo_original>
